<compile_context>
chip_gen: v7x
topology: tpu7x:2x2x1
jax: 0.10.0
libtpu: 0.0.40
codegen_flags: <defaults>
</compile_context>

<pallas_src>
import functools
import math

import jax
import jax.numpy as jnp
from jax import lax
from jax.experimental import pallas as pl
from jax.experimental.pallas import tpu as pltpu


def _mha_flash_kernel(q_ref, k_ref, v_ref, o_ref, m_ref, l_ref, acc_ref, *,
                      scale, num_heads, head_dim, block_k, seq_len,
                      needs_mask, matmul_dtype):
    """One grid step = one (batch, q-tile, kv-tile).

    Refs (heads packed along lanes, last dim == d_model):
      q_ref: (tq, d_model)   k_ref/v_ref: (tk, d_model)   o_ref: (tq, d_model)
    Scratch (f32, resident across the kv axis):
      m_ref/l_ref: (num_heads, tq, 1)   acc_ref: (num_heads, tq, head_dim)
    """
    ki = pl.program_id(2)

    @pl.when(ki == 0)
    def _init():
        m_ref[...] = jnp.full_like(m_ref, -jnp.inf)
        l_ref[...] = jnp.zeros_like(l_ref)
        acc_ref[...] = jnp.zeros_like(acc_ref)

    if needs_mask:
        # Mask padded key columns (global column index >= seq_len) to -inf.
        col = ki * block_k + lax.broadcasted_iota(jnp.int32, (1, block_k), 1)
        key_mask = col < seq_len                       # (1, tk)

    # All heads handled in one grid step; static loop is unrolled at trace
    # time.  NOTE: for large num_heads the head-grid-axis layout (see module
    # TODO) bounds live ranges better.
    for h in range(num_heads):
        lo = h * head_dim
        hi = lo + head_dim
        # Fold the softmax scale into q: (tq, head_dim) VPU multiply instead
        # of scaling the (tq, tk) score tile.
        qh = (q_ref[:, lo:hi] * scale).astype(matmul_dtype)   # (tq, hd)
        kh = k_ref[:, lo:hi].astype(matmul_dtype)             # (tk, hd)
        vh = v_ref[:, lo:hi].astype(matmul_dtype)             # (tk, hd)

        # scores: contract head_dim of both operands (no explicit k.T);
        # MXU consumes matmul_dtype, accumulation is f32.
        s = lax.dot_general(
            qh, kh,
            dimension_numbers=(((1,), (1,)), ((), ())),
            preferred_element_type=jnp.float32,
        )                                                     # (tq, tk) f32
        if needs_mask:
            s = jnp.where(key_mask, s, -jnp.inf)

        m_prev = m_ref[h]                                     # (tq, 1) f32
        m_new = jnp.maximum(m_prev, jnp.max(s, axis=-1, keepdims=True))
        alpha = jnp.exp(m_prev - m_new)                       # (tq, 1) f32

        # Probability tile in matmul_dtype (bf16 on v6e/v7x halves EUP + vreg
        # traffic and feeds the MXU natively); statistics stay f32.
        p = jnp.exp((s - m_new).astype(matmul_dtype))         # (tq, tk)

        l_ref[h] = alpha * l_ref[h] + jnp.sum(
            p.astype(jnp.float32), axis=-1, keepdims=True)
        acc_ref[h] = alpha * acc_ref[h] + jnp.dot(
            p, vh, preferred_element_type=jnp.float32)
        m_ref[h] = m_new

    @pl.when(ki == pl.num_programs(2) - 1)
    def _finalize():
        # Store each normalized head directly (no concatenate temporary).
        # Exact division: runs once per q tile, full precision is free.
        for h in range(num_heads):
            lo = h * head_dim
            o_ref[:, lo:lo + head_dim] = (
                acc_ref[h] / l_ref[h]).astype(o_ref.dtype)


def _round_up(x, m):
    return ((x + m - 1) // m) * m


def multi_head_attention(q, k, v, num_heads, *, block_q=None, block_k=None,
                         matmul_dtype=None, kv_buffer_count=2):
    """q, k, v: (batch, seq, d_model) -> (batch, seq, d_model)."""
    b, n, d_model = q.shape
    assert d_model % num_heads == 0
    assert k.shape == q.shape and v.shape == q.shape
    head_dim = d_model // num_heads

    # --- tile selection -----------------------------------------------------
    if block_k is None:
        # >= 256 keeps the PV matmul contraction deep enough for the 2x256 MXU
        # (v6e/v7x); smaller sequences just use one full tile.
        block_k = min(256, _round_up(n, 8))
    if block_q is None:
        # Large q tiles minimize K/V HBM re-streaming (traffic ~ n/block_q).
        block_q = min(1024, _round_up(n, block_k))
        # v7x megacore: keep >= 2 programs on the "parallel" grid axes.
        while block_q > block_k and b * ((n + block_q - 1) // block_q) < 2:
            block_q = max(block_k, block_q // 2)
    assert block_q % 8 == 0 and block_k % 8 == 0

    # Pad the sequence so both block sizes divide it; padded key columns are
    # masked to -inf inside the kernel, padded q rows are sliced off.
    lcm = block_q * block_k // math.gcd(block_q, block_k)
    n_pad = _round_up(n, lcm)
    needs_mask = n_pad != n
    if needs_mask:
        pad = ((0, 0), (0, n_pad - n), (0, 0))
        q = jnp.pad(q, pad)
        k = jnp.pad(k, pad)
        v = jnp.pad(v, pad)

    if matmul_dtype is None:
        matmul_dtype = q.dtype   # faithful default; pass jnp.bfloat16 for speed

    # Faithful to the reference: "/ head_dim ** (-0.5)" == "* sqrt(head_dim)".
    scale = float(head_dim) ** 0.5

    kernel = functools.partial(
        _mha_flash_kernel, scale=scale, num_heads=num_heads, head_dim=head_dim,
        block_k=block_k, seq_len=n, needs_mask=needs_mask,
        matmul_dtype=matmul_dtype)

    grid = (b, n_pad // block_q, n_pad // block_k)

    q_spec = pl.BlockSpec((None, block_q, d_model), lambda bi, qi, ki: (bi, qi, 0))
    o_spec = pl.BlockSpec((None, block_q, d_model), lambda bi, qi, ki: (bi, qi, 0))
    kv_kwargs = {}
    if kv_buffer_count != 2:
        # Deeper K/V pipelining (useful on v7x's 3.2 TB/s HBM).
        kv_kwargs["pipeline_mode"] = pl.Buffered(kv_buffer_count)
    kv_spec = pl.BlockSpec((None, block_k, d_model),
                           lambda bi, qi, ki: (bi, ki, 0), **kv_kwargs)

    # Explicit VMEM budget: double-buffered q/o/k/v blocks + f32 scratch
    # (+ headroom for the score/probability temporaries).
    itemsize = q.dtype.itemsize
    vmem_need = (
        2 * 2 * block_q * d_model * itemsize        # q + out blocks, x2 buffers
        + 2 * 2 * block_k * d_model * itemsize      # k + v blocks, x2 buffers
        + num_heads * block_q * head_dim * 4        # acc scratch (f32)
        + 2 * num_heads * block_q * 128 * 4         # m/l scratch (lane-padded)
        + 4 * block_q * block_k * 4                 # score/prob temporaries
    )
    vmem_limit = int(max(32 * 1024 * 1024, min(2 * vmem_need, 96 * 1024 * 1024)))

    out = pl.pallas_call(
        kernel,
        out_shape=jax.ShapeDtypeStruct((b, n_pad, d_model), q.dtype),
        grid_spec=pltpu.PrefetchScalarGridSpec(
            num_scalar_prefetch=0,
            grid=grid,
            in_specs=[q_spec, kv_spec, kv_spec],
            out_specs=o_spec,
            scratch_shapes=[
                pltpu.VMEM((num_heads, block_q, 1), jnp.float32),         # m
                pltpu.VMEM((num_heads, block_q, 1), jnp.float32),         # l
                pltpu.VMEM((num_heads, block_q, head_dim), jnp.float32),  # acc
            ],
        ),
        compiler_params=pltpu.CompilerParams(
            dimension_semantics=("parallel", "parallel", "arbitrary"),
            vmem_limit_bytes=vmem_limit,
        ),
    )(q, k, v)

    if needs_mask:
        out = out[:, :n, :]
    return out


def _reference(q, k, v, num_heads):
    b, n, d_model = q.shape
    hd = d_model // num_heads
    qh = q.reshape(b, n, num_heads, hd).transpose(0, 2, 1, 3)
    kh = k.reshape(b, n, num_heads, hd).transpose(0, 2, 1, 3)
    vh = v.reshape(b, n, num_heads, hd).transpose(0, 2, 1, 3)
    attn = jnp.einsum("bhqd,bhkd->bhqk", qh, kh) / (hd ** (-0.5))
    attn = jax.nn.softmax(attn, axis=-1)
    out = jnp.einsum("bhqk,bhkd->bhqd", attn, vh)
    return out.transpose(0, 2, 1, 3).reshape(b, n, d_model)


if __name__ == "__main__":
    # Shapes consistent with the module: batch=2, seq=8, d_model=32, heads=4.
    batch, d_model, num_heads = 2, 32, 4
    key = jax.random.PRNGKey(0)

    # 1) Small single-tile case (module-spec shapes).
    kq, kk, kv_ = jax.random.split(key, 3)
    q = jax.random.normal(kq, (batch, 8, d_model), dtype=jnp.float32)
    k = jax.random.normal(kk, (batch, 8, d_model), dtype=jnp.float32)
    v = jax.random.normal(kv_, (batch, 8, d_model), dtype=jnp.float32)
    out = jax.block_until_ready(multi_head_attention(q, k, v, num_heads))
    ref = _reference(q, k, v, num_heads)
    assert out.shape == (batch, 8, d_model)
    assert jnp.allclose(out, ref, atol=1e-3, rtol=1e-3), "mismatch (seq=8)"

    # 2) Multi-tile case exercising the online-softmax recursion across kv steps.
    k2q, k2k, k2v = jax.random.split(jax.random.PRNGKey(1), 3)
    q2 = jax.random.normal(k2q, (batch, 40, d_model), dtype=jnp.float32)
    k2 = jax.random.normal(k2k, (batch, 40, d_model), dtype=jnp.float32)
    v2 = jax.random.normal(k2v, (batch, 40, d_model), dtype=jnp.float32)
    out2 = jax.block_until_ready(
        multi_head_attention(q2, k2, v2, num_heads, block_q=8, block_k=8))
    ref2 = _reference(q2, k2, v2, num_heads)
    assert jnp.allclose(out2, ref2, atol=1e-3, rtol=1e-3), "mismatch (seq=40)"

    # 3) Ragged sequence length -> padding + key-mask path.
    k3q, k3k, k3v = jax.random.split(jax.random.PRNGKey(2), 3)
    q3 = jax.random.normal(k3q, (batch, 10, d_model), dtype=jnp.float32)
    k3 = jax.random.normal(k3k, (batch, 10, d_model), dtype=jnp.float32)
    v3 = jax.random.normal(k3v, (batch, 10, d_model), dtype=jnp.float32)
    out3 = jax.block_until_ready(multi_head_attention(q3, k3, v3, num_heads))
    ref3 = _reference(q3, k3, v3, num_heads)
    assert out3.shape == (batch, 10, d_model)
    assert jnp.allclose(out3, ref3, atol=1e-3, rtol=1e-3), "mismatch (seq=10)"

    # 4) bf16 MXU/EUP fast path (native on v5e/v6e/v7x MXUs), f32 statistics.
    out_bf16 = jax.block_until_ready(
        multi_head_attention(q2, k2, v2, num_heads, block_q=8, block_k=8,
                             matmul_dtype=jnp.bfloat16))
    assert jnp.allclose(out_bf16, ref2, atol=1e-1, rtol=1e-1), "mismatch (bf16)"

    print("KERNEL_OK")
</pallas_src>

<mosaic_0001>
module attributes {stable_mosaic.version = 11 : i64} {
  func.func @_mha_flash_kernel(%arg0: i32, %arg1: i32, %arg2: i32, %arg3: memref<1x8x32xf32, #tpu.memory_space<vmem>>, %arg4: memref<1x8x32xf32, #tpu.memory_space<vmem>>, %arg5: memref<1x8x32xf32, #tpu.memory_space<vmem>>, %arg6: memref<1x8x32xf32, #tpu.memory_space<vmem>>, %arg7: memref<4x8x1xf32, #tpu.memory_space<vmem>>, %arg8: memref<4x8x1xf32, #tpu.memory_space<vmem>>, %arg9: memref<4x8x8xf32, #tpu.memory_space<vmem>>) attributes {dimension_semantics = [#tpu.dimension_semantics<parallel>, #tpu.dimension_semantics<parallel>, #tpu.dimension_semantics<arbitrary>], iteration_bounds = array<i64: 2, 1, 1>, scalar_prefetch = 0 : i64, scratch_operands = 3 : i64, tpu.core_type = #tpu.core_type<tc>, window_params = [{transform_indices = @transform_0, window_bounds = array<i64: 1, 8, 32>}, {transform_indices = @transform_1, window_bounds = array<i64: 1, 8, 32>}, {transform_indices = @transform_2, window_bounds = array<i64: 1, 8, 32>}, {transform_indices = @transform_3, window_bounds = array<i64: 1, 8, 32>}]} {
    %c0_i32 = arith.constant 0 : i32
    %0 = arith.cmpi eq, %arg2, %c0_i32 : i32
    %1 = arith.extui %0 : i1 to i32
    %c0_i32_0 = arith.constant 0 : i32
    %2 = arith.cmpi ne, %1, %c0_i32_0 : i32
    scf.if %2 {
      %cst_123 = arith.constant 0xFF800000 : f32
      %166 = vector.broadcast %cst_123 : f32 to vector<4x8x1xf32>
      %c0_124 = arith.constant 0 : index
      %c0_125 = arith.constant 0 : index
      %c0_126 = arith.constant 0 : index
      %167 = vector.load %arg7[%c0_124, %c0_125, %c0_126] : memref<4x8x1xf32, #tpu.memory_space<vmem>>, vector<4x8x1xf32>
      tpu.vector_store %arg7[%c0_124, %c0_125, %c0_126], %166 {strides = array<i32>} : memref<4x8x1xf32, #tpu.memory_space<vmem>>, vector<4x8x1xf32>,
      %cst_127 = arith.constant 0.000000e+00 : f32
      %168 = vector.broadcast %cst_127 : f32 to vector<4x8x1xf32>
      %c0_128 = arith.constant 0 : index
      %c0_129 = arith.constant 0 : index
      %c0_130 = arith.constant 0 : index
      %169 = vector.load %arg8[%c0_128, %c0_129, %c0_130] : memref<4x8x1xf32, #tpu.memory_space<vmem>>, vector<4x8x1xf32>
      tpu.vector_store %arg8[%c0_128, %c0_129, %c0_130], %168 {strides = array<i32>} : memref<4x8x1xf32, #tpu.memory_space<vmem>>, vector<4x8x1xf32>,
      %cst_131 = arith.constant 0.000000e+00 : f32
      %170 = vector.broadcast %cst_131 : f32 to vector<4x8x8xf32>
      %c0_132 = arith.constant 0 : index
      %c0_133 = arith.constant 0 : index
      %c0_134 = arith.constant 0 : index
      %171 = vector.load %arg9[%c0_132, %c0_133, %c0_134] : memref<4x8x8xf32, #tpu.memory_space<vmem>>, vector<4x8x8xf32>
      tpu.vector_store %arg9[%c0_132, %c0_133, %c0_134], %170 {strides = array<i32>} : memref<4x8x8xf32, #tpu.memory_space<vmem>>, vector<4x8x8xf32>,
    } else {
    }
    %c0 = arith.constant 0 : index
    %c0_1 = arith.constant 0 : index
    %c0_2 = arith.constant 0 : index
    %3 = vector.load %arg3[%c0, %c0_1, %c0_2] : memref<1x8x32xf32, #tpu.memory_space<vmem>>, vector<1x8x8xf32>
    %4 = vector.shape_cast %3 : vector<1x8x8xf32> to vector<8x8xf32>
    %cst = arith.constant 2.82842708 : f32
    %5 = vector.broadcast %cst : f32 to vector<8x8xf32>
    %6 = arith.mulf %4, %5 : vector<8x8xf32>
    %c0_3 = arith.constant 0 : index
    %c0_4 = arith.constant 0 : index
    %c0_5 = arith.constant 0 : index
    %7 = vector.load %arg4[%c0_3, %c0_4, %c0_5] : memref<1x8x32xf32, #tpu.memory_space<vmem>>, vector<1x8x8xf32>
    %8 = vector.shape_cast %7 : vector<1x8x8xf32> to vector<8x8xf32>
    %c0_6 = arith.constant 0 : index
    %c0_7 = arith.constant 0 : index
    %c0_8 = arith.constant 0 : index
    %9 = vector.load %arg5[%c0_6, %c0_7, %c0_8] : memref<1x8x32xf32, #tpu.memory_space<vmem>>, vector<1x8x8xf32>
    %10 = vector.shape_cast %9 : vector<1x8x8xf32> to vector<8x8xf32>
    %cst_9 = arith.constant dense<0.000000e+00> : vector<8x8xf32>
    %11 = tpu.matmul %6, %8, %cst_9 {dimension_numbers = #tpu.dot_dimension_numbers<[1], [1], [0], [0], [0, 0, 1, 0], [], []>} : vector<8x8xf32>, vector<8x8xf32>, vector<8x8xf32> -> vector<8x8xf32>
    %c0_10 = arith.constant 0 : index
    %c0_11 = arith.constant 0 : index
    %c0_12 = arith.constant 0 : index
    %12 = vector.load %arg7[%c0_10, %c0_11, %c0_12] : memref<4x8x1xf32, #tpu.memory_space<vmem>>, vector<1x8x1xf32>
    %13 = vector.shape_cast %12 : vector<1x8x1xf32> to vector<8x1xf32>
    %cst_13 = arith.constant dense<0xFF800000> : vector<8xf32>
    %14 = vector.multi_reduction <maximumf>, %11, %cst_13 [1] : vector<8x8xf32> to vector<8xf32>
    %15 = vector.shape_cast %14 : vector<8xf32> to vector<8x1xf32>
    %16 = arith.maximumf %13, %15 : vector<8x1xf32>
    %17 = arith.subf %13, %16 : vector<8x1xf32>
    %18 = math.exp %17 : vector<8x1xf32>
    %19 = vector.broadcast %16 : vector<8x1xf32> to vector<8x8xf32>
    %20 = arith.subf %11, %19 : vector<8x8xf32>
    %21 = math.exp %20 : vector<8x8xf32>
    %c0_14 = arith.constant 0 : index
    %c0_15 = arith.constant 0 : index
    %c0_16 = arith.constant 0 : index
    %22 = vector.load %arg8[%c0_14, %c0_15, %c0_16] : memref<4x8x1xf32, #tpu.memory_space<vmem>>, vector<1x8x1xf32>
    %23 = vector.shape_cast %22 : vector<1x8x1xf32> to vector<8x1xf32>
    %24 = arith.mulf %18, %23 : vector<8x1xf32>
    %cst_17 = arith.constant dense<0.000000e+00> : vector<8xf32>
    %25 = vector.multi_reduction <add>, %21, %cst_17 [1] : vector<8x8xf32> to vector<8xf32>
    %26 = vector.shape_cast %25 : vector<8xf32> to vector<8x1xf32>
    %27 = arith.addf %24, %26 : vector<8x1xf32>
    %c0_18 = arith.constant 0 : index
    %c0_19 = arith.constant 0 : index
    %c0_20 = arith.constant 0 : index
    %28 = vector.load %arg8[%c0_18, %c0_19, %c0_20] : memref<4x8x1xf32, #tpu.memory_space<vmem>>, vector<1x8x1xf32>
    %29 = vector.shape_cast %28 : vector<1x8x1xf32> to vector<8x1xf32>
    %30 = vector.shape_cast %27 : vector<8x1xf32> to vector<1x8x1xf32>
    tpu.vector_store %arg8[%c0_18, %c0_19, %c0_20], %30 {strides = array<i32>} : memref<4x8x1xf32, #tpu.memory_space<vmem>>, vector<1x8x1xf32>,
    %c0_21 = arith.constant 0 : index
    %c0_22 = arith.constant 0 : index
    %c0_23 = arith.constant 0 : index
    %31 = vector.load %arg9[%c0_21, %c0_22, %c0_23] : memref<4x8x8xf32, #tpu.memory_space<vmem>>, vector<1x8x8xf32>
    %32 = vector.shape_cast %31 : vector<1x8x8xf32> to vector<8x8xf32>
    %33 = vector.broadcast %18 : vector<8x1xf32> to vector<8x8xf32>
    %34 = arith.mulf %33, %32 : vector<8x8xf32>
    %cst_24 = arith.constant dense<0.000000e+00> : vector<8x8xf32>
    %35 = tpu.matmul %21, %10, %cst_24 {dimension_numbers = #tpu.dot_dimension_numbers<[1], [0], [0], [1], [0, 0, 1, 1], [], []>} : vector<8x8xf32>, vector<8x8xf32>, vector<8x8xf32> -> vector<8x8xf32>
    %36 = arith.addf %34, %35 : vector<8x8xf32>
    %c0_25 = arith.constant 0 : index
    %c0_26 = arith.constant 0 : index
    %c0_27 = arith.constant 0 : index
    %37 = vector.load %arg9[%c0_25, %c0_26, %c0_27] : memref<4x8x8xf32, #tpu.memory_space<vmem>>, vector<1x8x8xf32>
    %38 = vector.shape_cast %37 : vector<1x8x8xf32> to vector<8x8xf32>
    %39 = vector.shape_cast %36 : vector<8x8xf32> to vector<1x8x8xf32>
    tpu.vector_store %arg9[%c0_25, %c0_26, %c0_27], %39 {strides = array<i32>} : memref<4x8x8xf32, #tpu.memory_space<vmem>>, vector<1x8x8xf32>,
    %c0_28 = arith.constant 0 : index
    %c0_29 = arith.constant 0 : index
    %c0_30 = arith.constant 0 : index
    %40 = vector.load %arg7[%c0_28, %c0_29, %c0_30] : memref<4x8x1xf32, #tpu.memory_space<vmem>>, vector<1x8x1xf32>
    %41 = vector.shape_cast %40 : vector<1x8x1xf32> to vector<8x1xf32>
    %42 = vector.shape_cast %16 : vector<8x1xf32> to vector<1x8x1xf32>
    tpu.vector_store %arg7[%c0_28, %c0_29, %c0_30], %42 {strides = array<i32>} : memref<4x8x1xf32, #tpu.memory_space<vmem>>, vector<1x8x1xf32>,
    %c0_31 = arith.constant 0 : index
    %c0_32 = arith.constant 0 : index
    %c8 = arith.constant 8 : index
    %43 = vector.load %arg3[%c0_31, %c0_32, %c8] : memref<1x8x32xf32, #tpu.memory_space<vmem>>, vector<1x8x8xf32>
    %44 = vector.shape_cast %43 : vector<1x8x8xf32> to vector<8x8xf32>
    %cst_33 = arith.constant 2.82842708 : f32
    %45 = vector.broadcast %cst_33 : f32 to vector<8x8xf32>
    %46 = arith.mulf %44, %45 : vector<8x8xf32>
    %c0_34 = arith.constant 0 : index
    %c0_35 = arith.constant 0 : index
    %c8_36 = arith.constant 8 : index
    %47 = vector.load %arg4[%c0_34, %c0_35, %c8_36] : memref<1x8x32xf32, #tpu.memory_space<vmem>>, vector<1x8x8xf32>
    %48 = vector.shape_cast %47 : vector<1x8x8xf32> to vector<8x8xf32>
    %c0_37 = arith.constant 0 : index
    %c0_38 = arith.constant 0 : index
    %c8_39 = arith.constant 8 : index
    %49 = vector.load %arg5[%c0_37, %c0_38, %c8_39] : memref<1x8x32xf32, #tpu.memory_space<vmem>>, vector<1x8x8xf32>
    %50 = vector.shape_cast %49 : vector<1x8x8xf32> to vector<8x8xf32>
    %cst_40 = arith.constant dense<0.000000e+00> : vector<8x8xf32>
    %51 = tpu.matmul %46, %48, %cst_40 {dimension_numbers = #tpu.dot_dimension_numbers<[1], [1], [0], [0], [0, 0, 1, 0], [], []>} : vector<8x8xf32>, vector<8x8xf32>, vector<8x8xf32> -> vector<8x8xf32>
    %c1 = arith.constant 1 : index
    %c0_41 = arith.constant 0 : index
    %c0_42 = arith.constant 0 : index
    %52 = vector.load %arg7[%c1, %c0_41, %c0_42] : memref<4x8x1xf32, #tpu.memory_space<vmem>>, vector<1x8x1xf32>
    %53 = vector.shape_cast %52 : vector<1x8x1xf32> to vector<8x1xf32>
    %cst_43 = arith.constant dense<0xFF800000> : vector<8xf32>
    %54 = vector.multi_reduction <maximumf>, %51, %cst_43 [1] : vector<8x8xf32> to vector<8xf32>
    %55 = vector.shape_cast %54 : vector<8xf32> to vector<8x1xf32>
    %56 = arith.maximumf %53, %55 : vector<8x1xf32>
    %57 = arith.subf %53, %56 : vector<8x1xf32>
    %58 = math.exp %57 : vector<8x1xf32>
    %59 = vector.broadcast %56 : vector<8x1xf32> to vector<8x8xf32>
    %60 = arith.subf %51, %59 : vector<8x8xf32>
    %61 = math.exp %60 : vector<8x8xf32>
    %c1_44 = arith.constant 1 : index
    %c0_45 = arith.constant 0 : index
    %c0_46 = arith.constant 0 : index
    %62 = vector.load %arg8[%c1_44, %c0_45, %c0_46] : memref<4x8x1xf32, #tpu.memory_space<vmem>>, vector<1x8x1xf32>
    %63 = vector.shape_cast %62 : vector<1x8x1xf32> to vector<8x1xf32>
    %64 = arith.mulf %58, %63 : vector<8x1xf32>
    %cst_47 = arith.constant dense<0.000000e+00> : vector<8xf32>
    %65 = vector.multi_reduction <add>, %61, %cst_47 [1] : vector<8x8xf32> to vector<8xf32>
    %66 = vector.shape_cast %65 : vector<8xf32> to vector<8x1xf32>
    %67 = arith.addf %64, %66 : vector<8x1xf32>
    %c1_48 = arith.constant 1 : index
    %c0_49 = arith.constant 0 : index
    %c0_50 = arith.constant 0 : index
    %68 = vector.load %arg8[%c1_48, %c0_49, %c0_50] : memref<4x8x1xf32, #tpu.memory_space<vmem>>, vector<1x8x1xf32>
    %69 = vector.shape_cast %68 : vector<1x8x1xf32> to vector<8x1xf32>
    %70 = vector.shape_cast %67 : vector<8x1xf32> to vector<1x8x1xf32>
    tpu.vector_store %arg8[%c1_48, %c0_49, %c0_50], %70 {strides = array<i32>} : memref<4x8x1xf32, #tpu.memory_space<vmem>>, vector<1x8x1xf32>,
    %c1_51 = arith.constant 1 : index
    %c0_52 = arith.constant 0 : index
    %c0_53 = arith.constant 0 : index
    %71 = vector.load %arg9[%c1_51, %c0_52, %c0_53] : memref<4x8x8xf32, #tpu.memory_space<vmem>>, vector<1x8x8xf32>
    %72 = vector.shape_cast %71 : vector<1x8x8xf32> to vector<8x8xf32>
    %73 = vector.broadcast %58 : vector<8x1xf32> to vector<8x8xf32>
    %74 = arith.mulf %73, %72 : vector<8x8xf32>
    %cst_54 = arith.constant dense<0.000000e+00> : vector<8x8xf32>
    %75 = tpu.matmul %61, %50, %cst_54 {dimension_numbers = #tpu.dot_dimension_numbers<[1], [0], [0], [1], [0, 0, 1, 1], [], []>} : vector<8x8xf32>, vector<8x8xf32>, vector<8x8xf32> -> vector<8x8xf32>
    %76 = arith.addf %74, %75 : vector<8x8xf32>
    %c1_55 = arith.constant 1 : index
    %c0_56 = arith.constant 0 : index
    %c0_57 = arith.constant 0 : index
    %77 = vector.load %arg9[%c1_55, %c0_56, %c0_57] : memref<4x8x8xf32, #tpu.memory_space<vmem>>, vector<1x8x8xf32>
    %78 = vector.shape_cast %77 : vector<1x8x8xf32> to vector<8x8xf32>
    %79 = vector.shape_cast %76 : vector<8x8xf32> to vector<1x8x8xf32>
    tpu.vector_store %arg9[%c1_55, %c0_56, %c0_57], %79 {strides = array<i32>} : memref<4x8x8xf32, #tpu.memory_space<vmem>>, vector<1x8x8xf32>,
    %c1_58 = arith.constant 1 : index
    %c0_59 = arith.constant 0 : index
    %c0_60 = arith.constant 0 : index
    %80 = vector.load %arg7[%c1_58, %c0_59, %c0_60] : memref<4x8x1xf32, #tpu.memory_space<vmem>>, vector<1x8x1xf32>
    %81 = vector.shape_cast %80 : vector<1x8x1xf32> to vector<8x1xf32>
    %82 = vector.shape_cast %56 : vector<8x1xf32> to vector<1x8x1xf32>
    tpu.vector_store %arg7[%c1_58, %c0_59, %c0_60], %82 {strides = array<i32>} : memref<4x8x1xf32, #tpu.memory_space<vmem>>, vector<1x8x1xf32>,
    %c0_61 = arith.constant 0 : index
    %c0_62 = arith.constant 0 : index
    %c16 = arith.constant 16 : index
    %83 = vector.load %arg3[%c0_61, %c0_62, %c16] : memref<1x8x32xf32, #tpu.memory_space<vmem>>, vector<1x8x8xf32>
    %84 = vector.shape_cast %83 : vector<1x8x8xf32> to vector<8x8xf32>
    %cst_63 = arith.constant 2.82842708 : f32
    %85 = vector.broadcast %cst_63 : f32 to vector<8x8xf32>
    %86 = arith.mulf %84, %85 : vector<8x8xf32>
    %c0_64 = arith.constant 0 : index
    %c0_65 = arith.constant 0 : index
    %c16_66 = arith.constant 16 : index
    %87 = vector.load %arg4[%c0_64, %c0_65, %c16_66] : memref<1x8x32xf32, #tpu.memory_space<vmem>>, vector<1x8x8xf32>
    %88 = vector.shape_cast %87 : vector<1x8x8xf32> to vector<8x8xf32>
    %c0_67 = arith.constant 0 : index
    %c0_68 = arith.constant 0 : index
    %c16_69 = arith.constant 16 : index
    %89 = vector.load %arg5[%c0_67, %c0_68, %c16_69] : memref<1x8x32xf32, #tpu.memory_space<vmem>>, vector<1x8x8xf32>
    %90 = vector.shape_cast %89 : vector<1x8x8xf32> to vector<8x8xf32>
    %cst_70 = arith.constant dense<0.000000e+00> : vector<8x8xf32>
    %91 = tpu.matmul %86, %88, %cst_70 {dimension_numbers = #tpu.dot_dimension_numbers<[1], [1], [0], [0], [0, 0, 1, 0], [], []>} : vector<8x8xf32>, vector<8x8xf32>, vector<8x8xf32> -> vector<8x8xf32>
    %c2 = arith.constant 2 : index
    %c0_71 = arith.constant 0 : index
    %c0_72 = arith.constant 0 : index
    %92 = vector.load %arg7[%c2, %c0_71, %c0_72] : memref<4x8x1xf32, #tpu.memory_space<vmem>>, vector<1x8x1xf32>
    %93 = vector.shape_cast %92 : vector<1x8x1xf32> to vector<8x1xf32>
    %cst_73 = arith.constant dense<0xFF800000> : vector<8xf32>
    %94 = vector.multi_reduction <maximumf>, %91, %cst_73 [1] : vector<8x8xf32> to vector<8xf32>
    %95 = vector.shape_cast %94 : vector<8xf32> to vector<8x1xf32>
    %96 = arith.maximumf %93, %95 : vector<8x1xf32>
    %97 = arith.subf %93, %96 : vector<8x1xf32>
    %98 = math.exp %97 : vector<8x1xf32>
    %99 = vector.broadcast %96 : vector<8x1xf32> to vector<8x8xf32>
    %100 = arith.subf %91, %99 : vector<8x8xf32>
    %101 = math.exp %100 : vector<8x8xf32>
    %c2_74 = arith.constant 2 : index
    %c0_75 = arith.constant 0 : index
    %c0_76 = arith.constant 0 : index
    %102 = vector.load %arg8[%c2_74, %c0_75, %c0_76] : memref<4x8x1xf32, #tpu.memory_space<vmem>>, vector<1x8x1xf32>
    %103 = vector.shape_cast %102 : vector<1x8x1xf32> to vector<8x1xf32>
    %104 = arith.mulf %98, %103 : vector<8x1xf32>
    %cst_77 = arith.constant dense<0.000000e+00> : vector<8xf32>
    %105 = vector.multi_reduction <add>, %101, %cst_77 [1] : vector<8x8xf32> to vector<8xf32>
    %106 = vector.shape_cast %105 : vector<8xf32> to vector<8x1xf32>
    %107 = arith.addf %104, %106 : vector<8x1xf32>
    %c2_78 = arith.constant 2 : index
    %c0_79 = arith.constant 0 : index
    %c0_80 = arith.constant 0 : index
    %108 = vector.load %arg8[%c2_78, %c0_79, %c0_80] : memref<4x8x1xf32, #tpu.memory_space<vmem>>, vector<1x8x1xf32>
    %109 = vector.shape_cast %108 : vector<1x8x1xf32> to vector<8x1xf32>
    %110 = vector.shape_cast %107 : vector<8x1xf32> to vector<1x8x1xf32>
    tpu.vector_store %arg8[%c2_78, %c0_79, %c0_80], %110 {strides = array<i32>} : memref<4x8x1xf32, #tpu.memory_space<vmem>>, vector<1x8x1xf32>,
    %c2_81 = arith.constant 2 : index
    %c0_82 = arith.constant 0 : index
    %c0_83 = arith.constant 0 : index
    %111 = vector.load %arg9[%c2_81, %c0_82, %c0_83] : memref<4x8x8xf32, #tpu.memory_space<vmem>>, vector<1x8x8xf32>
    %112 = vector.shape_cast %111 : vector<1x8x8xf32> to vector<8x8xf32>
    %113 = vector.broadcast %98 : vector<8x1xf32> to vector<8x8xf32>
    %114 = arith.mulf %113, %112 : vector<8x8xf32>
    %cst_84 = arith.constant dense<0.000000e+00> : vector<8x8xf32>
    %115 = tpu.matmul %101, %90, %cst_84 {dimension_numbers = #tpu.dot_dimension_numbers<[1], [0], [0], [1], [0, 0, 1, 1], [], []>} : vector<8x8xf32>, vector<8x8xf32>, vector<8x8xf32> -> vector<8x8xf32>
    %116 = arith.addf %114, %115 : vector<8x8xf32>
    %c2_85 = arith.constant 2 : index
    %c0_86 = arith.constant 0 : index
    %c0_87 = arith.constant 0 : index
    %117 = vector.load %arg9[%c2_85, %c0_86, %c0_87] : memref<4x8x8xf32, #tpu.memory_space<vmem>>, vector<1x8x8xf32>
    %118 = vector.shape_cast %117 : vector<1x8x8xf32> to vector<8x8xf32>
    %119 = vector.shape_cast %116 : vector<8x8xf32> to vector<1x8x8xf32>
    tpu.vector_store %arg9[%c2_85, %c0_86, %c0_87], %119 {strides = array<i32>} : memref<4x8x8xf32, #tpu.memory_space<vmem>>, vector<1x8x8xf32>,
    %c2_88 = arith.constant 2 : index
    %c0_89 = arith.constant 0 : index
    %c0_90 = arith.constant 0 : index
    %120 = vector.load %arg7[%c2_88, %c0_89, %c0_90] : memref<4x8x1xf32, #tpu.memory_space<vmem>>, vector<1x8x1xf32>
    %121 = vector.shape_cast %120 : vector<1x8x1xf32> to vector<8x1xf32>
    %122 = vector.shape_cast %96 : vector<8x1xf32> to vector<1x8x1xf32>
    tpu.vector_store %arg7[%c2_88, %c0_89, %c0_90], %122 {strides = array<i32>} : memref<4x8x1xf32, #tpu.memory_space<vmem>>, vector<1x8x1xf32>,
    %c0_91 = arith.constant 0 : index
    %c0_92 = arith.constant 0 : index
    %c24 = arith.constant 24 : index
    %123 = vector.load %arg3[%c0_91, %c0_92, %c24] : memref<1x8x32xf32, #tpu.memory_space<vmem>>, vector<1x8x8xf32>
    %124 = vector.shape_cast %123 : vector<1x8x8xf32> to vector<8x8xf32>
    %cst_93 = arith.constant 2.82842708 : f32
    %125 = vector.broadcast %cst_93 : f32 to vector<8x8xf32>
    %126 = arith.mulf %124, %125 : vector<8x8xf32>
    %c0_94 = arith.constant 0 : index
    %c0_95 = arith.constant 0 : index
    %c24_96 = arith.constant 24 : index
    %127 = vector.load %arg4[%c0_94, %c0_95, %c24_96] : memref<1x8x32xf32, #tpu.memory_space<vmem>>, vector<1x8x8xf32>
    %128 = vector.shape_cast %127 : vector<1x8x8xf32> to vector<8x8xf32>
    %c0_97 = arith.constant 0 : index
    %c0_98 = arith.constant 0 : index
    %c24_99 = arith.constant 24 : index
    %129 = vector.load %arg5[%c0_97, %c0_98, %c24_99] : memref<1x8x32xf32, #tpu.memory_space<vmem>>, vector<1x8x8xf32>
    %130 = vector.shape_cast %129 : vector<1x8x8xf32> to vector<8x8xf32>
    %cst_100 = arith.constant dense<0.000000e+00> : vector<8x8xf32>
    %131 = tpu.matmul %126, %128, %cst_100 {dimension_numbers = #tpu.dot_dimension_numbers<[1], [1], [0], [0], [0, 0, 1, 0], [], []>} : vector<8x8xf32>, vector<8x8xf32>, vector<8x8xf32> -> vector<8x8xf32>
    %c3 = arith.constant 3 : index
    %c0_101 = arith.constant 0 : index
    %c0_102 = arith.constant 0 : index
    %132 = vector.load %arg7[%c3, %c0_101, %c0_102] : memref<4x8x1xf32, #tpu.memory_space<vmem>>, vector<1x8x1xf32>
    %133 = vector.shape_cast %132 : vector<1x8x1xf32> to vector<8x1xf32>
    %cst_103 = arith.constant dense<0xFF800000> : vector<8xf32>
    %134 = vector.multi_reduction <maximumf>, %131, %cst_103 [1] : vector<8x8xf32> to vector<8xf32>
    %135 = vector.shape_cast %134 : vector<8xf32> to vector<8x1xf32>
    %136 = arith.maximumf %133, %135 : vector<8x1xf32>
    %137 = arith.subf %133, %136 : vector<8x1xf32>
    %138 = math.exp %137 : vector<8x1xf32>
    %139 = vector.broadcast %136 : vector<8x1xf32> to vector<8x8xf32>
    %140 = arith.subf %131, %139 : vector<8x8xf32>
    %141 = math.exp %140 : vector<8x8xf32>
    %c3_104 = arith.constant 3 : index
    %c0_105 = arith.constant 0 : index
    %c0_106 = arith.constant 0 : index
    %142 = vector.load %arg8[%c3_104, %c0_105, %c0_106] : memref<4x8x1xf32, #tpu.memory_space<vmem>>, vector<1x8x1xf32>
    %143 = vector.shape_cast %142 : vector<1x8x1xf32> to vector<8x1xf32>
    %144 = arith.mulf %138, %143 : vector<8x1xf32>
    %cst_107 = arith.constant dense<0.000000e+00> : vector<8xf32>
    %145 = vector.multi_reduction <add>, %141, %cst_107 [1] : vector<8x8xf32> to vector<8xf32>
    %146 = vector.shape_cast %145 : vector<8xf32> to vector<8x1xf32>
    %147 = arith.addf %144, %146 : vector<8x1xf32>
    %c3_108 = arith.constant 3 : index
    %c0_109 = arith.constant 0 : index
    %c0_110 = arith.constant 0 : index
    %148 = vector.load %arg8[%c3_108, %c0_109, %c0_110] : memref<4x8x1xf32, #tpu.memory_space<vmem>>, vector<1x8x1xf32>
    %149 = vector.shape_cast %148 : vector<1x8x1xf32> to vector<8x1xf32>
    %150 = vector.shape_cast %147 : vector<8x1xf32> to vector<1x8x1xf32>
    tpu.vector_store %arg8[%c3_108, %c0_109, %c0_110], %150 {strides = array<i32>} : memref<4x8x1xf32, #tpu.memory_space<vmem>>, vector<1x8x1xf32>,
    %c3_111 = arith.constant 3 : index
    %c0_112 = arith.constant 0 : index
    %c0_113 = arith.constant 0 : index
    %151 = vector.load %arg9[%c3_111, %c0_112, %c0_113] : memref<4x8x8xf32, #tpu.memory_space<vmem>>, vector<1x8x8xf32>
    %152 = vector.shape_cast %151 : vector<1x8x8xf32> to vector<8x8xf32>
    %153 = vector.broadcast %138 : vector<8x1xf32> to vector<8x8xf32>
    %154 = arith.mulf %153, %152 : vector<8x8xf32>
    %cst_114 = arith.constant dense<0.000000e+00> : vector<8x8xf32>
    %155 = tpu.matmul %141, %130, %cst_114 {dimension_numbers = #tpu.dot_dimension_numbers<[1], [0], [0], [1], [0, 0, 1, 1], [], []>} : vector<8x8xf32>, vector<8x8xf32>, vector<8x8xf32> -> vector<8x8xf32>
    %156 = arith.addf %154, %155 : vector<8x8xf32>
    %c3_115 = arith.constant 3 : index
    %c0_116 = arith.constant 0 : index
    %c0_117 = arith.constant 0 : index
    %157 = vector.load %arg9[%c3_115, %c0_116, %c0_117] : memref<4x8x8xf32, #tpu.memory_space<vmem>>, vector<1x8x8xf32>
    %158 = vector.shape_cast %157 : vector<1x8x8xf32> to vector<8x8xf32>
    %159 = vector.shape_cast %156 : vector<8x8xf32> to vector<1x8x8xf32>
    tpu.vector_store %arg9[%c3_115, %c0_116, %c0_117], %159 {strides = array<i32>} : memref<4x8x8xf32, #tpu.memory_space<vmem>>, vector<1x8x8xf32>,
    %c3_118 = arith.constant 3 : index
    %c0_119 = arith.constant 0 : index
    %c0_120 = arith.constant 0 : index
    %160 = vector.load %arg7[%c3_118, %c0_119, %c0_120] : memref<4x8x1xf32, #tpu.memory_space<vmem>>, vector<1x8x1xf32>
    %161 = vector.shape_cast %160 : vector<1x8x1xf32> to vector<8x1xf32>
    %162 = vector.shape_cast %136 : vector<8x1xf32> to vector<1x8x1xf32>
    tpu.vector_store %arg7[%c3_118, %c0_119, %c0_120], %162 {strides = array<i32>} : memref<4x8x1xf32, #tpu.memory_space<vmem>>, vector<1x8x1xf32>,
    %c0_i32_121 = arith.constant 0 : i32
    %163 = arith.cmpi eq, %arg2, %c0_i32_121 : i32
    %164 = arith.extui %163 : i1 to i32
    %c0_i32_122 = arith.constant 0 : i32
    %165 = arith.cmpi ne, %164, %c0_i32_122 : i32
    scf.if %165 {
      %c0_123 = arith.constant 0 : index
      %c0_124 = arith.constant 0 : index
      %c0_125 = arith.constant 0 : index
      %166 = vector.load %arg9[%c0_123, %c0_124, %c0_125] : memref<4x8x8xf32, #tpu.memory_space<vmem>>, vector<1x8x8xf32>
      %167 = vector.shape_cast %166 : vector<1x8x8xf32> to vector<8x8xf32>
      %c0_126 = arith.constant 0 : index
      %c0_127 = arith.constant 0 : index
      %c0_128 = arith.constant 0 : index
      %168 = vector.load %arg8[%c0_126, %c0_127, %c0_128] : memref<4x8x1xf32, #tpu.memory_space<vmem>>, vector<1x8x1xf32>
      %169 = vector.shape_cast %168 : vector<1x8x1xf32> to vector<8x1xf32>
      %170 = vector.broadcast %169 : vector<8x1xf32> to vector<8x8xf32>
      %171 = arith.divf %167, %170 : vector<8x8xf32>
      %c0_129 = arith.constant 0 : index
      %c0_130 = arith.constant 0 : index
      %c0_131 = arith.constant 0 : index
      %172 = vector.load %arg6[%c0_129, %c0_130, %c0_131] : memref<1x8x32xf32, #tpu.memory_space<vmem>>, vector<1x8x8xf32>
      %173 = vector.shape_cast %172 : vector<1x8x8xf32> to vector<8x8xf32>
      %174 = vector.shape_cast %171 : vector<8x8xf32> to vector<1x8x8xf32>
      tpu.vector_store %arg6[%c0_129, %c0_130, %c0_131], %174 {strides = array<i32>} : memref<1x8x32xf32, #tpu.memory_space<vmem>>, vector<1x8x8xf32>,
      %c1_132 = arith.constant 1 : index
      %c0_133 = arith.constant 0 : index
      %c0_134 = arith.constant 0 : index
      %175 = vector.load %arg9[%c1_132, %c0_133, %c0_134] : memref<4x8x8xf32, #tpu.memory_space<vmem>>, vector<1x8x8xf32>
      %176 = vector.shape_cast %175 : vector<1x8x8xf32> to vector<8x8xf32>
      %c1_135 = arith.constant 1 : index
      %c0_136 = arith.constant 0 : index
      %c0_137 = arith.constant 0 : index
      %177 = vector.load %arg8[%c1_135, %c0_136, %c0_137] : memref<4x8x1xf32, #tpu.memory_space<vmem>>, vector<1x8x1xf32>
      %178 = vector.shape_cast %177 : vector<1x8x1xf32> to vector<8x1xf32>
      %179 = vector.broadcast %178 : vector<8x1xf32> to vector<8x8xf32>
      %180 = arith.divf %176, %179 : vector<8x8xf32>
      %c0_138 = arith.constant 0 : index
      %c0_139 = arith.constant 0 : index
      %c8_140 = arith.constant 8 : index
      %181 = vector.load %arg6[%c0_138, %c0_139, %c8_140] : memref<1x8x32xf32, #tpu.memory_space<vmem>>, vector<1x8x8xf32>
      %182 = vector.shape_cast %181 : vector<1x8x8xf32> to vector<8x8xf32>
      %183 = vector.shape_cast %180 : vector<8x8xf32> to vector<1x8x8xf32>
      tpu.vector_store %arg6[%c0_138, %c0_139, %c8_140], %183 {strides = array<i32>} : memref<1x8x32xf32, #tpu.memory_space<vmem>>, vector<1x8x8xf32>,
      %c2_141 = arith.constant 2 : index
      %c0_142 = arith.constant 0 : index
      %c0_143 = arith.constant 0 : index
      %184 = vector.load %arg9[%c2_141, %c0_142, %c0_143] : memref<4x8x8xf32, #tpu.memory_space<vmem>>, vector<1x8x8xf32>
      %185 = vector.shape_cast %184 : vector<1x8x8xf32> to vector<8x8xf32>
      %c2_144 = arith.constant 2 : index
      %c0_145 = arith.constant 0 : index
      %c0_146 = arith.constant 0 : index
      %186 = vector.load %arg8[%c2_144, %c0_145, %c0_146] : memref<4x8x1xf32, #tpu.memory_space<vmem>>, vector<1x8x1xf32>
      %187 = vector.shape_cast %186 : vector<1x8x1xf32> to vector<8x1xf32>
      %188 = vector.broadcast %187 : vector<8x1xf32> to vector<8x8xf32>
      %189 = arith.divf %185, %188 : vector<8x8xf32>
      %c0_147 = arith.constant 0 : index
      %c0_148 = arith.constant 0 : index
      %c16_149 = arith.constant 16 : index
      %190 = vector.load %arg6[%c0_147, %c0_148, %c16_149] : memref<1x8x32xf32, #tpu.memory_space<vmem>>, vector<1x8x8xf32>
      %191 = vector.shape_cast %190 : vector<1x8x8xf32> to vector<8x8xf32>
      %192 = vector.shape_cast %189 : vector<8x8xf32> to vector<1x8x8xf32>
      tpu.vector_store %arg6[%c0_147, %c0_148, %c16_149], %192 {strides = array<i32>} : memref<1x8x32xf32, #tpu.memory_space<vmem>>, vector<1x8x8xf32>,
      %c3_150 = arith.constant 3 : index
      %c0_151 = arith.constant 0 : index
      %c0_152 = arith.constant 0 : index
      %193 = vector.load %arg9[%c3_150, %c0_151, %c0_152] : memref<4x8x8xf32, #tpu.memory_space<vmem>>, vector<1x8x8xf32>
      %194 = vector.shape_cast %193 : vector<1x8x8xf32> to vector<8x8xf32>
      %c3_153 = arith.constant 3 : index
      %c0_154 = arith.constant 0 : index
      %c0_155 = arith.constant 0 : index
      %195 = vector.load %arg8[%c3_153, %c0_154, %c0_155] : memref<4x8x1xf32, #tpu.memory_space<vmem>>, vector<1x8x1xf32>
      %196 = vector.shape_cast %195 : vector<1x8x1xf32> to vector<8x1xf32>
      %197 = vector.broadcast %196 : vector<8x1xf32> to vector<8x8xf32>
      %198 = arith.divf %194, %197 : vector<8x8xf32>
      %c0_156 = arith.constant 0 : index
      %c0_157 = arith.constant 0 : index
      %c24_158 = arith.constant 24 : index
      %199 = vector.load %arg6[%c0_156, %c0_157, %c24_158] : memref<1x8x32xf32, #tpu.memory_space<vmem>>, vector<1x8x8xf32>
      %200 = vector.shape_cast %199 : vector<1x8x8xf32> to vector<8x8xf32>
      %201 = vector.shape_cast %198 : vector<8x8xf32> to vector<1x8x8xf32>
      tpu.vector_store %arg6[%c0_156, %c0_157, %c24_158], %201 {strides = array<i32>} : memref<1x8x32xf32, #tpu.memory_space<vmem>>, vector<1x8x8xf32>,
    } else {
    }
    return
  }
  func.func @transform_0(%arg0: i32, %arg1: i32, %arg2: i32) -> (i32, i32, i32) {
    %c0_i32 = arith.constant 0 : i32
    %c0_i32_0 = arith.constant 0 : i32
    return %arg0, %arg1, %c0_i32 : i32, i32, i32
  }
  func.func @transform_1(%arg0: i32, %arg1: i32, %arg2: i32) -> (i32, i32, i32) {
    %c0_i32 = arith.constant 0 : i32
    %c0_i32_0 = arith.constant 0 : i32
    return %arg0, %arg2, %c0_i32 : i32, i32, i32
  }
  func.func @transform_2(%arg0: i32, %arg1: i32, %arg2: i32) -> (i32, i32, i32) {
    %c0_i32 = arith.constant 0 : i32
    %c0_i32_0 = arith.constant 0 : i32
    return %arg0, %arg2, %c0_i32 : i32, i32, i32
  }
  func.func @transform_3(%arg0: i32, %arg1: i32, %arg2: i32) -> (i32, i32, i32) {
    %c0_i32 = arith.constant 0 : i32
    %c0_i32_0 = arith.constant 0 : i32
    return %arg0, %arg1, %c0_i32 : i32, i32, i32
  }
}

</mosaic_0001>

<llo_original>
// kernel: tpu_custom_call.1
$region0: #{tpu_custom_call.1}
  #allocation0 [shape = 'u32[]', space=smem, size = 0x4, offset = 0x4, fixed_abs, tag = 'smem constant byte address 0x4 - core index']
  #allocation1 [shape = 'u32[144,128]{1,0:T(1,128)}', space=vmem, size = 0x12000, scoped, tag = 'internal scratch']
  #allocation2 [shape = 'f32[4,8,1]{2,1,0:T(8,128)}', space=vmem, size = 0x4000, scoped, tag = 'scratch operand']
  #allocation3 [shape = 'f32[4,8,1]{2,1,0:T(8,128)}', space=vmem, size = 0x4000, scoped, tag = 'scratch operand']
  #allocation4 [shape = 'f32[4,8,8]{2,1,0:T(8,128)}', space=vmem, size = 0x4000, scoped, tag = 'scratch operand']
  %s0 = inlined_call_operand.hbm [shape: f32[2,8,32], index: 0, kind: input, shape index: {}]
  %s1 = inlined_call_operand.hbm [shape: f32[2,8,32], index: 1, kind: input, shape index: {}]
  %s2 = inlined_call_operand.hbm [shape: f32[2,8,32], index: 2, kind: input, shape index: {}]
  %s3 = inlined_call_operand.hbm [shape: f32[2,8,32], index: 3, kind: output, shape index: {}]
  %s4 = sld [smem:[#allocation0]]
  $region65: #{tpu_custom_call.1} parent=0
    _
  %s6 = ssub.s32 1, %s4
  %s7 = scalar_select 0, %s6, %s4
  $region1: #{tpu_custom_call.1} parent=0
    #allocation5 [shape = 'u8[8192]{0}', space=vmem, size = 0x2000, scoped, tag = 'input window, operand 0']
    #allocation6 [shape = 's32[2]{0}', space=sflag, size = 0x8, scoped, tag = 'scoped memory for tpu_custom_call.1']
    #allocation7 [shape = 's32[2]{0}', space=sflag, size = 0x8, scoped, tag = 'scoped memory for tpu_custom_call.1']
    #allocation8 [shape = 'u8[8192]{0}', space=vmem, size = 0x2000, scoped, tag = 'input window, operand 1']
    #allocation9 [shape = 's32[2]{0}', space=sflag, size = 0x8, scoped, tag = 'scoped memory for tpu_custom_call.1']
    #allocation10 [shape = 'u8[8192]{0}', space=vmem, size = 0x2000, scoped, tag = 'input window, operand 2']
    #allocation11 [shape = 'u8[8192]{0}', space=vmem, size = 0x2000, scoped, tag = 'output window, operand 0']
    %8 = vsyncpa [#allocation6], 0
    %s9 = scalar_lea.sflag [#allocation6], 1
    %10 = vsyncpa %s9, 0
    %11 = vsyncpa [#allocation9], 0
    %s12 = scalar_lea.sflag [#allocation9], 1
    %13 = vsyncpa %s12, 0
    %14 = vsyncpa [#allocation7], 0
    %s15 = scalar_lea.sflag [#allocation7], 1
    %16 = vsyncpa %s15, 0
    loop: start=0, step=1, limit=4
    $region2: #{tpu_custom_call.1} parent=1 // loop_pre_header
      _
    $region3: #{tpu_custom_call.1} parent=1 // loop_header
      %s18 = sphi 0, %s22
      %p19 = scmp.ge.s32.totalorder %s18, 4
      %s25 = sphi 0, %s44
      %s26 = sphi 0, %s40
      %s27 = sphi 0, %s36
      %s28 = sphi 0, %s25
      %s29 = sphi 0, %s26
      %s30 = sphi 0, %s27
      %s31 = sphi 0, %s28
      %s32 = sphi 0, %s29
      %s33 = sphi 0, %s30
      %s49 = sphi 0, %s51
      %s52 = sphi 0, %s49
      %s53 = sphi 0, %s52
      %s69 = sphi 0, %s53
      %s77 = sphi 0, %s79
      %s80 = sphi 0, %s77
      %s81 = sphi 0, %s80
      %s97 = sphi 0, %s81
      %s105 = sphi 0, %s107
      %s108 = sphi 0, %s105
      %s109 = sphi 0, %s108
      %s125 = sphi 0, %s109
      %s133 = sphi 0, %s135
      %s136 = sphi 0, %s133
      %s137 = sphi 0, %s136
      %s153 = sphi 0, %s137
    $region4: #{tpu_custom_call.1} parent=1 // loop_header_branch
      %21 = sbr.rel (%p19) target = $region8
    $region5: #{tpu_custom_call.1} parent=1 // loop_body
      %s23 = ssub.s32 %s18, 1
      %s24 = ssub.s32 %s18, 2
      %s34 = sadd.s32 1, %s27
      %p35 = scmp.ge.s32.totalorder %s34, 1
      %s36 = scalar_select %p35, 0, %s34
      %s37 = sadd.s32 1, %s26
      %s38 = scalar_select %p35, %s37, %s26
      %p39 = scmp.ge.s32.totalorder %s38, 1
      %s40 = scalar_select %p39, 0, %s38
      %s41 = sadd.s32 1, %s25
      %s42 = scalar_select %p39, %s41, %s25
      %p43 = scmp.ge.s32.totalorder %s42, 2
      %s44 = scalar_select %p43, 0, %s42
      %s45 = ssub.s32 %s25, %s44
      %s46 = ssub.s32 %s26, %s40
      %s47 = sor.u32 %s45, %s46
      %p48 = scmp.eq.s32.totalorder %s47, 0
      %s50 = sadd.s32 %s49, 1
      %s51 = scalar_select %p48, %s49, %s50
      %p54 = pneg %p48
      %p55 = scmp.eq.s32.totalorder %s18, 1
      %p56 = por %p54, %p55
      %p57 = scmp.ne.s32.totalorder %s49, %s52
      %p58 = scmp.eq.s32.totalorder %s18, 0
      %p59 = por %p57, %p58
      %p60 = scmp.ne.s32.totalorder %s49, %s52
      %p61 = scmp.eq.s32.totalorder %s23, 1
      %p62 = por %p60, %p61
      %p63 = scmp.ne.s32.totalorder %s52, %s53
      %p64 = scmp.eq.s32.totalorder %s23, 0
      %p65 = por %p63, %p64
      %p66 = scmp.ne.s32.totalorder %s52, %s53
      %p67 = scmp.eq.s32.totalorder %s24, 1
      %p68 = por %p66, %p67
      %p70 = scmp.ne.s32.totalorder %s53, %s69
      %p71 = scmp.eq.s32.totalorder %s24, 0
      %p72 = por %p70, %p71
      %s73 = ssub.s32 %s25, %s44
      %s74 = ssub.s32 %s27, %s36
      %s75 = sor.u32 %s73, %s74
      %p76 = scmp.eq.s32.totalorder %s75, 0
      %s78 = sadd.s32 %s77, 1
      %s79 = scalar_select %p76, %s77, %s78
      %p82 = pneg %p76
      %p83 = scmp.eq.s32.totalorder %s18, 1
      %p84 = por %p82, %p83
      %p85 = scmp.ne.s32.totalorder %s77, %s80
      %p86 = scmp.eq.s32.totalorder %s18, 0
      %p87 = por %p85, %p86
      %p88 = scmp.ne.s32.totalorder %s77, %s80
      %p89 = scmp.eq.s32.totalorder %s23, 1
      %p90 = por %p88, %p89
      %p91 = scmp.ne.s32.totalorder %s80, %s81
      %p92 = scmp.eq.s32.totalorder %s23, 0
      %p93 = por %p91, %p92
      %p94 = scmp.ne.s32.totalorder %s80, %s81
      %p95 = scmp.eq.s32.totalorder %s24, 1
      %p96 = por %p94, %p95
      %p98 = scmp.ne.s32.totalorder %s81, %s97
      %p99 = scmp.eq.s32.totalorder %s24, 0
      %p100 = por %p98, %p99
      %s101 = ssub.s32 %s25, %s44
      %s102 = ssub.s32 %s27, %s36
      %s103 = sor.u32 %s101, %s102
      %p104 = scmp.eq.s32.totalorder %s103, 0
      %s106 = sadd.s32 %s105, 1
      %s107 = scalar_select %p104, %s105, %s106
      %p110 = pneg %p104
      %p111 = scmp.eq.s32.totalorder %s18, 1
      %p112 = por %p110, %p111
      %p113 = scmp.ne.s32.totalorder %s105, %s108
      %p114 = scmp.eq.s32.totalorder %s18, 0
      %p115 = por %p113, %p114
      %p116 = scmp.ne.s32.totalorder %s105, %s108
      %p117 = scmp.eq.s32.totalorder %s23, 1
      %p118 = por %p116, %p117
      %p119 = scmp.ne.s32.totalorder %s108, %s109
      %p120 = scmp.eq.s32.totalorder %s23, 0
      %p121 = por %p119, %p120
      %p122 = scmp.ne.s32.totalorder %s108, %s109
      %p123 = scmp.eq.s32.totalorder %s24, 1
      %p124 = por %p122, %p123
      %p126 = scmp.ne.s32.totalorder %s109, %s125
      %p127 = scmp.eq.s32.totalorder %s24, 0
      %p128 = por %p126, %p127
      %s129 = ssub.s32 %s25, %s44
      %s130 = ssub.s32 %s26, %s40
      %s131 = sor.u32 %s129, %s130
      %p132 = scmp.eq.s32.totalorder %s131, 0
      %s134 = sadd.s32 %s133, 1
      %s135 = scalar_select %p132, %s133, %s134
      %p138 = pneg %p132
      %p139 = scmp.eq.s32.totalorder %s18, 1
      %p140 = por %p138, %p139
      %p141 = scmp.ne.s32.totalorder %s133, %s136
      %p142 = scmp.eq.s32.totalorder %s18, 0
      %p143 = por %p141, %p142
      %p144 = scmp.ne.s32.totalorder %s133, %s136
      %p145 = scmp.eq.s32.totalorder %s23, 1
      %p146 = por %p144, %p145
      %p147 = scmp.ne.s32.totalorder %s136, %s137
      %p148 = scmp.eq.s32.totalorder %s23, 0
      %p149 = por %p147, %p148
      %p150 = scmp.ne.s32.totalorder %s136, %s137
      %p151 = scmp.eq.s32.totalorder %s24, 1
      %p152 = por %p150, %p151
      %p154 = scmp.ne.s32.totalorder %s137, %s153
      %p155 = scmp.eq.s32.totalorder %s24, 0
      %p156 = por %p154, %p155
      %p157 = scmp.le.s32.totalorder 1, %s18
      %p158 = scmp.lt.s32.totalorder %s18, 3
      %p159 = pnand %p157, %p158
      %p160 = pneg %p159
      // Predicated region
      $region9: #{tpu_custom_call.1} parent=5 // pred_check
        _
      $region10: #{tpu_custom_call.1} parent=5 // pred_check_branch
        %162 = sbr.rel (%p159) target = $region12
      $region11: #{tpu_custom_call.1} parent=5 // pred_region
        %s163 = ssub.s32 %s18, 1
      $region12: #{tpu_custom_call.1} parent=5 // pred_fallthru
        _
      %p164 = scmp.lt.s32.totalorder %s18, 2
      // Predicated region
      $region13: #{tpu_custom_call.1} parent=5 // pred_check
        %p165 = pneg %p164
      $region14: #{tpu_custom_call.1} parent=5 // pred_check_branch
        %167 = sbr.rel (%p165) target = $region16
      $region15: #{tpu_custom_call.1} parent=5 // pred_region
        // Predicated region
        $region17: #{tpu_custom_call.1} parent=15 // pred_check
          %p168 = pneg %p59
        $region18: #{tpu_custom_call.1} parent=15 // pred_check_branch
          %170 = sbr.rel (%p168) target = $region20
        $region19: #{tpu_custom_call.1} parent=15 // pred_region
          %s171 = sand.u32 %s49, 1
          %s172 = scalar_lea.sflag [#allocation6], %s171
          %s173 = sand.u32 %s49, 1
          %s174 = smul.addr %s173, 8
          %s175 = scalar_lea.vmem [#allocation5], %s174
          %s177 = ssub.s32 128, 128
          %178 = vsyncadd %s172, %s177
          %s179 = sadd.s32 %s26, %s25
          %s180 = smul.addr %s179, 128
          %s181 = scalar_lea.hbm %s0, %s180
          %s183 = sshll.u32 %s175, 4
          %s184 = int_to_ptr.vmem [resolvable:$true] %s183
          %186 = dma.hbm_to_vmem [thread:$0]  %s181, 128, %s184, %s172
        $region20: #{tpu_custom_call.1} parent=15 // pred_fallthru
          _
        // Predicated region
        $region21: #{tpu_custom_call.1} parent=15 // pred_check
          %p187 = pneg %p87
        $region22: #{tpu_custom_call.1} parent=15 // pred_check_branch
          %189 = sbr.rel (%p187) target = $region24
        $region23: #{tpu_custom_call.1} parent=15 // pred_region
          %s190 = sand.u32 %s18, 1
          %s191 = scalar_lea.sflag [#allocation9], %s190
          %s192 = sand.u32 %s77, 1
          %s193 = smul.addr %s192, 8
          %s194 = scalar_lea.vmem [#allocation8], %s193
          %s196 = ssub.s32 128, 128
          %197 = vsyncadd %s191, %s196
          %s198 = sadd.s32 %s27, %s25
          %s199 = smul.addr %s198, 128
          %s200 = scalar_lea.hbm %s1, %s199
          %s202 = sshll.u32 %s194, 4
          %s203 = int_to_ptr.vmem [resolvable:$true] %s202
          %205 = dma.hbm_to_vmem [thread:$0]  %s200, 128, %s203, %s191
        $region24: #{tpu_custom_call.1} parent=15 // pred_fallthru
          _
        // Predicated region
        $region25: #{tpu_custom_call.1} parent=15 // pred_check
          %p206 = pneg %p115
        $region26: #{tpu_custom_call.1} parent=15 // pred_check_branch
          %208 = sbr.rel (%p206) target = $region28
        $region27: #{tpu_custom_call.1} parent=15 // pred_region
          %s209 = sand.u32 %s18, 1
          %s210 = scalar_lea.sflag [#allocation9], %s209
          %s211 = sand.u32 %s105, 1
          %s212 = smul.addr %s211, 8
          %s213 = scalar_lea.vmem [#allocation10], %s212
          %s215 = ssub.s32 128, 128
          %216 = vsyncadd %s210, %s215
          %s217 = sadd.s32 %s27, %s25
          %s218 = smul.addr %s217, 128
          %s219 = scalar_lea.hbm %s2, %s218
          %s221 = sshll.u32 %s213, 4
          %s222 = int_to_ptr.vmem [resolvable:$true] %s221
          %224 = dma.hbm_to_vmem [thread:$0]  %s219, 128, %s222, %s210
        $region28: #{tpu_custom_call.1} parent=15 // pred_fallthru
          _
      $region16: #{tpu_custom_call.1} parent=5 // pred_fallthru
        _
      %p225 = scmp.le.s32.totalorder 1, %s18
      %p226 = scmp.lt.s32.totalorder %s18, 3
      %p227 = pnand %p225, %p226
      %p228 = pneg %p227
      // Predicated region
      $region29: #{tpu_custom_call.1} parent=5 // pred_check
        _
      $region30: #{tpu_custom_call.1} parent=5 // pred_check_branch
        %230 = sbr.rel (%p227) target = $region32
      $region31: #{tpu_custom_call.1} parent=5 // pred_region
        %s231 = ssub.s32 %s18, 1
        %s232 = sand.u32 %s52, 1
        %s233 = scalar_lea.sflag [#allocation6], %s232
        %s234 = sand.u32 %s52, 1
        %s235 = smul.addr %s234, 8
        %s236 = scalar_lea.vmem [#allocation5], %s235
        // Predicated region
        $region33: #{tpu_custom_call.1} parent=31 // pred_check
          %p237 = pneg %p65
        $region34: #{tpu_custom_call.1} parent=31 // pred_check_branch
          %239 = sbr.rel (%p237) target = $region36
        $region35: #{tpu_custom_call.1} parent=31 // pred_region
          %240 = dma.done %s233, 128
        $region36: #{tpu_custom_call.1} parent=31 // pred_fallthru
          _
        %s241 = sand.u32 %s23, 1
        %s242 = scalar_lea.sflag [#allocation9], %s241
        %s243 = sand.u32 %s80, 1
        %s244 = smul.addr %s243, 8
        %s245 = scalar_lea.vmem [#allocation8], %s244
        // Predicated region
        $region37: #{tpu_custom_call.1} parent=31 // pred_check
          %p246 = pneg %p93
        $region38: #{tpu_custom_call.1} parent=31 // pred_check_branch
          %248 = sbr.rel (%p246) target = $region40
        $region39: #{tpu_custom_call.1} parent=31 // pred_region
          %249 = dma.done %s242, 128
        $region40: #{tpu_custom_call.1} parent=31 // pred_fallthru
          _
        %s250 = sand.u32 %s23, 1
        %s251 = scalar_lea.sflag [#allocation9], %s250
        %s252 = sand.u32 %s108, 1
        %s253 = smul.addr %s252, 8
        %s254 = scalar_lea.vmem [#allocation10], %s253
        // Predicated region
        $region41: #{tpu_custom_call.1} parent=31 // pred_check
          %p255 = pneg %p121
        $region42: #{tpu_custom_call.1} parent=31 // pred_check_branch
          %257 = sbr.rel (%p255) target = $region44
        $region43: #{tpu_custom_call.1} parent=31 // pred_region
          %258 = dma.done %s251, 128
        $region44: #{tpu_custom_call.1} parent=31 // pred_fallthru
          _
        %s259 = sand.u32 %s52, 1
        %s260 = scalar_lea.sflag [#allocation6], %s259
        %s261 = sand.u32 %s52, 1
        %s262 = smul.addr %s261, 8
        %s263 = scalar_lea.vmem [#allocation5], %s262
        %p264 = pneg %p65
        %p265 = pneg %p62
        %s266 = sand.u32 %s23, 1
        %s267 = scalar_lea.sflag [#allocation9], %s266
        %s268 = sand.u32 %s80, 1
        %s269 = smul.addr %s268, 8
        %s270 = scalar_lea.vmem [#allocation8], %s269
        %p271 = pneg %p93
        %p272 = pneg %p90
        %s273 = sand.u32 %s23, 1
        %s274 = scalar_lea.sflag [#allocation9], %s273
        %s275 = sand.u32 %s108, 1
        %s276 = smul.addr %s275, 8
        %s277 = scalar_lea.vmem [#allocation10], %s276
        %p278 = pneg %p121
        %p279 = pneg %p118
        %p280 = pneg %p149
        %p281 = pneg %p146
        %s282 = sand.u32 %s136, 1
        %s283 = scalar_lea.sflag [#allocation7], %s282
        %s284 = sand.u32 %s136, 1
        %s285 = smul.addr %s284, 8
        %s286 = scalar_lea.vmem [#allocation11], %s285
        %p287 = scmp.eq.s32.totalorder %s30, 0
        // Predicated region
        $region45: #{tpu_custom_call.1} parent=31 // pred_check
          %p288 = pneg %p287
        $region46: #{tpu_custom_call.1} parent=31 // pred_check_branch
          %290 = sbr.rel (%p288) target = $region48
        $region47: #{tpu_custom_call.1} parent=31 // pred_region
          %vm291 = vcmask 7168
          %292 = vst.msk [vmem:[#allocation2] sm:$0xff] %vm291, -inf
          %293 = vst.msk [vmem:[#allocation2 + $0x8] sm:$0xff] %vm291, -inf
          %294 = vst.msk [vmem:[#allocation2 + $0x10] sm:$0xff] %vm291, -inf
          %295 = vst.msk [vmem:[#allocation2 + $0x18] sm:$0xff] %vm291, -inf
          %296 = vst.msk [vmem:[#allocation3] sm:$0xff] %vm291, 0.0
          %297 = vst.msk [vmem:[#allocation3 + $0x8] sm:$0xff] %vm291, 0.0
          %298 = vst.msk [vmem:[#allocation3 + $0x10] sm:$0xff] %vm291, 0.0
          %299 = vst.msk [vmem:[#allocation3 + $0x18] sm:$0xff] %vm291, 0.0
          %vm300 = vcmask 64512
          %301 = vst.msk [vmem:[#allocation4] sm:$0xff] %vm300, 0.0
          %302 = vst.msk [vmem:[#allocation4 + $0x8] sm:$0xff] %vm300, 0.0
          %303 = vst.msk [vmem:[#allocation4 + $0x10] sm:$0xff] %vm300, 0.0
          %304 = vst.msk [vmem:[#allocation4 + $0x18] sm:$0xff] %vm300, 0.0
        $region48: #{tpu_custom_call.1} parent=31 // pred_fallthru
          _
        %v305 = vld [vmem:[%s236] sm:$0xff]
        %v306 = vmul.f32 %v305, 2.828427
        %v307 = vld [vmem:[%s245] sm:$0xff]
        %v308 = vld [vmem:[%s254] sm:$0xff]
        %vm309 = vcmask 64512
        %v311 = vsel %vm309, %v306, 0
        %v314 = vsel %vm309, %v307, 0
        %316 = vmatprep.subr.mxu0 0.0
        %317 = vmatpush1.xpose.msra.mxu0 %v314
        %318 = vmatprep.subr.mxu0 0.0
        %319 = vmatpush1.xpose.msra.mxu0 0.0
        %320 = vmatprep.subr.mxu0 0.0
        %321 = vmatpush1.xpose.msra.mxu0 0.0
        %322 = vmatprep.subr.mxu0 0.0
        %323 = vmatpush1.xpose.msra.mxu0 0.0
        %324 = vmatprep.subr.mxu0 0.0
        %325 = vmatpush1.xpose.msra.mxu0 0.0
        %326 = vmatprep.subr.mxu0 0.0
        %327 = vmatpush1.xpose.msra.mxu0 0.0
        %328 = vmatprep.subr.mxu0 0.0
        %329 = vmatpush1.xpose.msra.mxu0 0.0
        %330 = vmatprep.subr.mxu0 0.0
        %331 = vmatpush1.xpose.msra.mxu0 0.0
        %332 = vmatprep.subr.mxu0 0.0
        %333 = vmatpush1.xpose.msra.mxu0 0.0
        %334 = vmatprep.subr.mxu0 0.0
        %335 = vmatpush1.xpose.msra.mxu0 0.0
        %336 = vmatprep.subr.mxu0 0.0
        %337 = vmatpush1.xpose.msra.mxu0 0.0
        %338 = vmatprep.subr.mxu0 0.0
        %339 = vmatpush1.xpose.msra.mxu0 0.0
        %340 = vmatprep.subr.mxu0 0.0
        %341 = vmatpush1.xpose.msra.mxu0 0.0
        %342 = vmatprep.subr.mxu0 0.0
        %343 = vmatpush1.xpose.msra.mxu0 0.0
        %344 = vmatprep.subr.mxu0 0.0
        %345 = vmatpush1.xpose.msra.mxu0 0.0
        %346 = vmatprep.subr.mxu0 0.0
        %347 = vmatpush1.xpose.msra.mxu0 0.0
        %348 = vmatprep.subr.mxu0 0.0
        %349 = vmatpush1.xpose.msra.mxu0 0.0
        %350 = vmatprep.subr.mxu0 0.0
        %351 = vmatpush1.xpose.msra.mxu0 0.0
        %352 = vmatprep.subr.mxu0 0.0
        %353 = vmatpush1.xpose.msra.mxu0 0.0
        %354 = vmatprep.subr.mxu0 0.0
        %355 = vmatpush1.xpose.msra.mxu0 0.0
        %356 = vmatprep.subr.mxu0 0.0
        %357 = vmatpush1.xpose.msra.mxu0 0.0
        %358 = vmatprep.subr.mxu0 0.0
        %359 = vmatpush1.xpose.msra.mxu0 0.0
        %360 = vmatprep.subr.mxu0 0.0
        %361 = vmatpush1.xpose.msra.mxu0 0.0
        %362 = vmatprep.subr.mxu0 0.0
        %363 = vmatpush1.xpose.msra.mxu0 0.0
        %364 = vmatprep.subr.mxu0 0.0
        %365 = vmatpush1.xpose.msra.mxu0 0.0
        %366 = vmatprep.subr.mxu0 0.0
        %367 = vmatpush1.xpose.msra.mxu0 0.0
        %368 = vmatprep.subr.mxu0 0.0
        %369 = vmatpush1.xpose.msra.mxu0 0.0
        %370 = vmatprep.subr.mxu0 0.0
        %371 = vmatpush1.xpose.msra.mxu0 0.0
        %372 = vmatprep.subr.mxu0 0.0
        %373 = vmatpush1.xpose.msra.mxu0 0.0
        %374 = vmatprep.subr.mxu0 0.0
        %375 = vmatpush1.xpose.msra.mxu0 0.0
        %376 = vmatprep.subr.mxu0 0.0
        %377 = vmatpush1.xpose.msra.mxu0 0.0
        %378 = vmatprep.subr.mxu0 0.0
        %379 = vmatpush1.xpose.msra.mxu0 0.0
        %380 = vmatprep.mubr.f32.mxu0 0.0
        %381 = vmatmul.mubr.f32.gmra.mrb[0].mxu0 %v311
        %v382 = vpop.f32.mrb[0].mxu0
        %v383 = vadd.f32 0.0, %v382
        %v384 = vpop.f32.mrb[0].mxu0
        %385 = vdwg.mxu0
        %v386 = vld [vmem:[#allocation2] sm:$0xff]
        %v387 = vsel %vm309, %v383, -inf
        %388 = vmax.xlane.f32.xlu0 %v387
        %v389 = vpop.xlane.xlu0 %388
        %v390 = vmax.f32 %v386, %v389
        %v391 = vsub.f32 %v386, %v390
        %v392 = vmul.f32 %v391, 1.442695
        %v393 = vpow.pop %v392
        %395 = vset.pattern.permute.xlu0 0
        %396 = vperm.xlu0 %395, %v390
        %v397 = vpop.permute.xlu0 %396
        %v399 = vsub.f32 %v383, %v397
        %v400 = vmul.f32 %v399, 1.442695
        %v401 = vpow.pop %v400
        %v402 = vld [vmem:[#allocation3] sm:$0xff]
        %v403 = vmul.f32 %v393, %v402
        %v404 = vsel %vm309, %v401, 0.0
        %405 = vadd.xlane.f32.xlu0 %v404
        %v406 = vpop.xlane.xlu0 %405
        %v407 = vadd.f32 %v403, %v406
        %vm408 = vcmask 7168
        %409 = vst.msk [vmem:[#allocation3] sm:$0xff] %vm408, %v407
        %v410 = vld [vmem:[#allocation4] sm:$0xff]
        %412 = vset.pattern.permute.xlu0 0
        %413 = vperm.xlu0 %412, %v393
        %v414 = vpop.permute.xlu0 %413
        %v416 = vmul.f32 %v414, %v410
        %v418 = vsel %vm309, %v401, 0
        %420 = vmatprep.subr.mxu0 0.0
        %421 = vmatpush1.msra.mxu0 %v308
        %422 = vmatprep.subr.mxu0 0.0
        %423 = vmatpush1.msra.mxu0 0.0
        %424 = vmatprep.subr.mxu0 0.0
        %425 = vmatpush1.msra.mxu0 0.0
        %426 = vmatprep.subr.mxu0 0.0
        %427 = vmatpush1.msra.mxu0 0.0
        %428 = vmatprep.subr.mxu0 0.0
        %429 = vmatpush1.msra.mxu0 0.0
        %430 = vmatprep.subr.mxu0 0.0
        %431 = vmatpush1.msra.mxu0 0.0
        %432 = vmatprep.subr.mxu0 0.0
        %433 = vmatpush1.msra.mxu0 0.0
        %434 = vmatprep.subr.mxu0 0.0
        %435 = vmatpush1.msra.mxu0 0.0
        %436 = vmatprep.subr.mxu0 0.0
        %437 = vmatpush1.msra.mxu0 0.0
        %438 = vmatprep.subr.mxu0 0.0
        %439 = vmatpush1.msra.mxu0 0.0
        %440 = vmatprep.subr.mxu0 0.0
        %441 = vmatpush1.msra.mxu0 0.0
        %442 = vmatprep.subr.mxu0 0.0
        %443 = vmatpush1.msra.mxu0 0.0
        %444 = vmatprep.subr.mxu0 0.0
        %445 = vmatpush1.msra.mxu0 0.0
        %446 = vmatprep.subr.mxu0 0.0
        %447 = vmatpush1.msra.mxu0 0.0
        %448 = vmatprep.subr.mxu0 0.0
        %449 = vmatpush1.msra.mxu0 0.0
        %450 = vmatprep.subr.mxu0 0.0
        %451 = vmatpush1.msra.mxu0 0.0
        %452 = vmatprep.subr.mxu0 0.0
        %453 = vmatpush1.msra.mxu0 0.0
        %454 = vmatprep.subr.mxu0 0.0
        %455 = vmatpush1.msra.mxu0 0.0
        %456 = vmatprep.subr.mxu0 0.0
        %457 = vmatpush1.msra.mxu0 0.0
        %458 = vmatprep.subr.mxu0 0.0
        %459 = vmatpush1.msra.mxu0 0.0
        %460 = vmatprep.subr.mxu0 0.0
        %461 = vmatpush1.msra.mxu0 0.0
        %462 = vmatprep.subr.mxu0 0.0
        %463 = vmatpush1.msra.mxu0 0.0
        %464 = vmatprep.subr.mxu0 0.0
        %465 = vmatpush1.msra.mxu0 0.0
        %466 = vmatprep.subr.mxu0 0.0
        %467 = vmatpush1.msra.mxu0 0.0
        %468 = vmatprep.subr.mxu0 0.0
        %469 = vmatpush1.msra.mxu0 0.0
        %470 = vmatprep.subr.mxu0 0.0
        %471 = vmatpush1.msra.mxu0 0.0
        %472 = vmatprep.subr.mxu0 0.0
        %473 = vmatpush1.msra.mxu0 0.0
        %474 = vmatprep.subr.mxu0 0.0
        %475 = vmatpush1.msra.mxu0 0.0
        %476 = vmatprep.subr.mxu0 0.0
        %477 = vmatpush1.msra.mxu0 0.0
        %478 = vmatprep.subr.mxu0 0.0
        %479 = vmatpush1.msra.mxu0 0.0
        %480 = vmatprep.subr.mxu0 0.0
        %481 = vmatpush1.msra.mxu0 0.0
        %482 = vmatprep.subr.mxu0 0.0
        %483 = vmatpush1.msra.mxu0 0.0
        %484 = vmatprep.mubr.f32.mxu0 0.0
        %485 = vmatmul.mubr.f32.gmra.mrb[0].mxu0 %v418
        %v486 = vpop.f32.mrb[0].mxu0
        %v487 = vadd.f32 0.0, %v486
        %v488 = vpop.f32.mrb[0].mxu0
        %489 = vdwg.mxu0
        %v490 = vadd.f32 %v416, %v487
        %491 = vst.msk [vmem:[#allocation4] sm:$0xff] %vm309, %v490
        %492 = vst.msk [vmem:[#allocation2] sm:$0xff] %vm408, %v390
        %v493 = vld [vmem:[%s236] sm:$0xff]
        %v494 = vmul.f32 %v493, 2.828427
        %v495 = vld [vmem:[%s245] sm:$0xff]
        %v496 = vld [vmem:[%s254] sm:$0xff]
        %498 = vrot.lane.b32.xlu0 %v494, 120
        %v499 = vpop.permute.xlu0 %498
        %501 = vrot.lane.b32.xlu0 %v495, 120
        %v502 = vpop.permute.xlu0 %501
        %v503 = vsel %vm309, %v499, 0
        %v505 = vsel %vm309, %v502, 0
        %507 = vmatprep.subr.mxu0 0.0
        %508 = vmatpush1.xpose.msra.mxu0 %v505
        %509 = vmatprep.subr.mxu0 0.0
        %510 = vmatpush1.xpose.msra.mxu0 0.0
        %511 = vmatprep.subr.mxu0 0.0
        %512 = vmatpush1.xpose.msra.mxu0 0.0
        %513 = vmatprep.subr.mxu0 0.0
        %514 = vmatpush1.xpose.msra.mxu0 0.0
        %515 = vmatprep.subr.mxu0 0.0
        %516 = vmatpush1.xpose.msra.mxu0 0.0
        %517 = vmatprep.subr.mxu0 0.0
        %518 = vmatpush1.xpose.msra.mxu0 0.0
        %519 = vmatprep.subr.mxu0 0.0
        %520 = vmatpush1.xpose.msra.mxu0 0.0
        %521 = vmatprep.subr.mxu0 0.0
        %522 = vmatpush1.xpose.msra.mxu0 0.0
        %523 = vmatprep.subr.mxu0 0.0
        %524 = vmatpush1.xpose.msra.mxu0 0.0
        %525 = vmatprep.subr.mxu0 0.0
        %526 = vmatpush1.xpose.msra.mxu0 0.0
        %527 = vmatprep.subr.mxu0 0.0
        %528 = vmatpush1.xpose.msra.mxu0 0.0
        %529 = vmatprep.subr.mxu0 0.0
        %530 = vmatpush1.xpose.msra.mxu0 0.0
        %531 = vmatprep.subr.mxu0 0.0
        %532 = vmatpush1.xpose.msra.mxu0 0.0
        %533 = vmatprep.subr.mxu0 0.0
        %534 = vmatpush1.xpose.msra.mxu0 0.0
        %535 = vmatprep.subr.mxu0 0.0
        %536 = vmatpush1.xpose.msra.mxu0 0.0
        %537 = vmatprep.subr.mxu0 0.0
        %538 = vmatpush1.xpose.msra.mxu0 0.0
        %539 = vmatprep.subr.mxu0 0.0
        %540 = vmatpush1.xpose.msra.mxu0 0.0
        %541 = vmatprep.subr.mxu0 0.0
        %542 = vmatpush1.xpose.msra.mxu0 0.0
        %543 = vmatprep.subr.mxu0 0.0
        %544 = vmatpush1.xpose.msra.mxu0 0.0
        %545 = vmatprep.subr.mxu0 0.0
        %546 = vmatpush1.xpose.msra.mxu0 0.0
        %547 = vmatprep.subr.mxu0 0.0
        %548 = vmatpush1.xpose.msra.mxu0 0.0
        %549 = vmatprep.subr.mxu0 0.0
        %550 = vmatpush1.xpose.msra.mxu0 0.0
        %551 = vmatprep.subr.mxu0 0.0
        %552 = vmatpush1.xpose.msra.mxu0 0.0
        %553 = vmatprep.subr.mxu0 0.0
        %554 = vmatpush1.xpose.msra.mxu0 0.0
        %555 = vmatprep.subr.mxu0 0.0
        %556 = vmatpush1.xpose.msra.mxu0 0.0
        %557 = vmatprep.subr.mxu0 0.0
        %558 = vmatpush1.xpose.msra.mxu0 0.0
        %559 = vmatprep.subr.mxu0 0.0
        %560 = vmatpush1.xpose.msra.mxu0 0.0
        %561 = vmatprep.subr.mxu0 0.0
        %562 = vmatpush1.xpose.msra.mxu0 0.0
        %563 = vmatprep.subr.mxu0 0.0
        %564 = vmatpush1.xpose.msra.mxu0 0.0
        %565 = vmatprep.subr.mxu0 0.0
        %566 = vmatpush1.xpose.msra.mxu0 0.0
        %567 = vmatprep.subr.mxu0 0.0
        %568 = vmatpush1.xpose.msra.mxu0 0.0
        %569 = vmatprep.subr.mxu0 0.0
        %570 = vmatpush1.xpose.msra.mxu0 0.0
        %571 = vmatprep.mubr.f32.mxu0 0.0
        %572 = vmatmul.mubr.f32.gmra.mrb[0].mxu0 %v503
        %v573 = vpop.f32.mrb[0].mxu0
        %v574 = vadd.f32 0.0, %v573
        %v575 = vpop.f32.mrb[0].mxu0
        %576 = vdwg.mxu0
        %s577 = scalar_lea.vmem [#allocation2], 8
        %v578 = vld [vmem:[%s577] sm:$0xff]
        %v579 = vsel %vm309, %v574, -inf
        %580 = vmax.xlane.f32.xlu0 %v579
        %v581 = vpop.xlane.xlu0 %580
        %v582 = vmax.f32 %v578, %v581
        %v583 = vsub.f32 %v578, %v582
        %v584 = vmul.f32 %v583, 1.442695
        %v585 = vpow.pop %v584
        %587 = vset.pattern.permute.xlu0 0
        %588 = vperm.xlu0 %587, %v582
        %v589 = vpop.permute.xlu0 %588
        %v591 = vsub.f32 %v574, %v589
        %v592 = vmul.f32 %v591, 1.442695
        %v593 = vpow.pop %v592
        %s594 = scalar_lea.vmem [#allocation3], 8
        %v595 = vld [vmem:[%s594] sm:$0xff]
        %v596 = vmul.f32 %v585, %v595
        %v597 = vsel %vm309, %v593, 0.0
        %598 = vadd.xlane.f32.xlu0 %v597
        %v599 = vpop.xlane.xlu0 %598
        %v600 = vadd.f32 %v596, %v599
        %601 = vst.msk [vmem:[%s594] sm:$0xff] %vm408, %v600
        %s602 = scalar_lea.vmem [#allocation4], 8
        %v603 = vld [vmem:[%s602] sm:$0xff]
        %605 = vset.pattern.permute.xlu0 0
        %606 = vperm.xlu0 %605, %v585
        %v607 = vpop.permute.xlu0 %606
        %v609 = vmul.f32 %v607, %v603
        %611 = vrot.lane.b32.xlu0 %v496, 120
        %v612 = vpop.permute.xlu0 %611
        %v615 = vsel %vm309, %v593, 0
        %617 = vmatprep.subr.mxu0 0.0
        %618 = vmatpush1.msra.mxu0 %v612
        %619 = vmatprep.subr.mxu0 0.0
        %620 = vmatpush1.msra.mxu0 0.0
        %621 = vmatprep.subr.mxu0 0.0
        %622 = vmatpush1.msra.mxu0 0.0
        %623 = vmatprep.subr.mxu0 0.0
        %624 = vmatpush1.msra.mxu0 0.0
        %625 = vmatprep.subr.mxu0 0.0
        %626 = vmatpush1.msra.mxu0 0.0
        %627 = vmatprep.subr.mxu0 0.0
        %628 = vmatpush1.msra.mxu0 0.0
        %629 = vmatprep.subr.mxu0 0.0
        %630 = vmatpush1.msra.mxu0 0.0
        %631 = vmatprep.subr.mxu0 0.0
        %632 = vmatpush1.msra.mxu0 0.0
        %633 = vmatprep.subr.mxu0 0.0
        %634 = vmatpush1.msra.mxu0 0.0
        %635 = vmatprep.subr.mxu0 0.0
        %636 = vmatpush1.msra.mxu0 0.0
        %637 = vmatprep.subr.mxu0 0.0
        %638 = vmatpush1.msra.mxu0 0.0
        %639 = vmatprep.subr.mxu0 0.0
        %640 = vmatpush1.msra.mxu0 0.0
        %641 = vmatprep.subr.mxu0 0.0
        %642 = vmatpush1.msra.mxu0 0.0
        %643 = vmatprep.subr.mxu0 0.0
        %644 = vmatpush1.msra.mxu0 0.0
        %645 = vmatprep.subr.mxu0 0.0
        %646 = vmatpush1.msra.mxu0 0.0
        %647 = vmatprep.subr.mxu0 0.0
        %648 = vmatpush1.msra.mxu0 0.0
        %649 = vmatprep.subr.mxu0 0.0
        %650 = vmatpush1.msra.mxu0 0.0
        %651 = vmatprep.subr.mxu0 0.0
        %652 = vmatpush1.msra.mxu0 0.0
        %653 = vmatprep.subr.mxu0 0.0
        %654 = vmatpush1.msra.mxu0 0.0
        %655 = vmatprep.subr.mxu0 0.0
        %656 = vmatpush1.msra.mxu0 0.0
        %657 = vmatprep.subr.mxu0 0.0
        %658 = vmatpush1.msra.mxu0 0.0
        %659 = vmatprep.subr.mxu0 0.0
        %660 = vmatpush1.msra.mxu0 0.0
        %661 = vmatprep.subr.mxu0 0.0
        %662 = vmatpush1.msra.mxu0 0.0
        %663 = vmatprep.subr.mxu0 0.0
        %664 = vmatpush1.msra.mxu0 0.0
        %665 = vmatprep.subr.mxu0 0.0
        %666 = vmatpush1.msra.mxu0 0.0
        %667 = vmatprep.subr.mxu0 0.0
        %668 = vmatpush1.msra.mxu0 0.0
        %669 = vmatprep.subr.mxu0 0.0
        %670 = vmatpush1.msra.mxu0 0.0
        %671 = vmatprep.subr.mxu0 0.0
        %672 = vmatpush1.msra.mxu0 0.0
        %673 = vmatprep.subr.mxu0 0.0
        %674 = vmatpush1.msra.mxu0 0.0
        %675 = vmatprep.subr.mxu0 0.0
        %676 = vmatpush1.msra.mxu0 0.0
        %677 = vmatprep.subr.mxu0 0.0
        %678 = vmatpush1.msra.mxu0 0.0
        %679 = vmatprep.subr.mxu0 0.0
        %680 = vmatpush1.msra.mxu0 0.0
        %681 = vmatprep.mubr.f32.mxu0 0.0
        %682 = vmatmul.mubr.f32.gmra.mrb[0].mxu0 %v615
        %v683 = vpop.f32.mrb[0].mxu0
        %v684 = vadd.f32 0.0, %v683
        %v685 = vpop.f32.mrb[0].mxu0
        %686 = vdwg.mxu0
        %v687 = vadd.f32 %v609, %v684
        %688 = vst.msk [vmem:[%s602] sm:$0xff] %vm309, %v687
        %689 = vst.msk [vmem:[%s577] sm:$0xff] %vm408, %v582
        %v690 = vld [vmem:[%s236] sm:$0xff]
        %v691 = vmul.f32 %v690, 2.828427
        %v692 = vld [vmem:[%s245] sm:$0xff]
        %v693 = vld [vmem:[%s254] sm:$0xff]
        %695 = vrot.lane.b32.xlu0 %v691, 112
        %v696 = vpop.permute.xlu0 %695
        %698 = vrot.lane.b32.xlu0 %v692, 112
        %v699 = vpop.permute.xlu0 %698
        %v700 = vsel %vm309, %v696, 0
        %v702 = vsel %vm309, %v699, 0
        %704 = vmatprep.subr.mxu0 0.0
        %705 = vmatpush1.xpose.msra.mxu0 %v702
        %706 = vmatprep.subr.mxu0 0.0
        %707 = vmatpush1.xpose.msra.mxu0 0.0
        %708 = vmatprep.subr.mxu0 0.0
        %709 = vmatpush1.xpose.msra.mxu0 0.0
        %710 = vmatprep.subr.mxu0 0.0
        %711 = vmatpush1.xpose.msra.mxu0 0.0
        %712 = vmatprep.subr.mxu0 0.0
        %713 = vmatpush1.xpose.msra.mxu0 0.0
        %714 = vmatprep.subr.mxu0 0.0
        %715 = vmatpush1.xpose.msra.mxu0 0.0
        %716 = vmatprep.subr.mxu0 0.0
        %717 = vmatpush1.xpose.msra.mxu0 0.0
        %718 = vmatprep.subr.mxu0 0.0
        %719 = vmatpush1.xpose.msra.mxu0 0.0
        %720 = vmatprep.subr.mxu0 0.0
        %721 = vmatpush1.xpose.msra.mxu0 0.0
        %722 = vmatprep.subr.mxu0 0.0
        %723 = vmatpush1.xpose.msra.mxu0 0.0
        %724 = vmatprep.subr.mxu0 0.0
        %725 = vmatpush1.xpose.msra.mxu0 0.0
        %726 = vmatprep.subr.mxu0 0.0
        %727 = vmatpush1.xpose.msra.mxu0 0.0
        %728 = vmatprep.subr.mxu0 0.0
        %729 = vmatpush1.xpose.msra.mxu0 0.0
        %730 = vmatprep.subr.mxu0 0.0
        %731 = vmatpush1.xpose.msra.mxu0 0.0
        %732 = vmatprep.subr.mxu0 0.0
        %733 = vmatpush1.xpose.msra.mxu0 0.0
        %734 = vmatprep.subr.mxu0 0.0
        %735 = vmatpush1.xpose.msra.mxu0 0.0
        %736 = vmatprep.subr.mxu0 0.0
        %737 = vmatpush1.xpose.msra.mxu0 0.0
        %738 = vmatprep.subr.mxu0 0.0
        %739 = vmatpush1.xpose.msra.mxu0 0.0
        %740 = vmatprep.subr.mxu0 0.0
        %741 = vmatpush1.xpose.msra.mxu0 0.0
        %742 = vmatprep.subr.mxu0 0.0
        %743 = vmatpush1.xpose.msra.mxu0 0.0
        %744 = vmatprep.subr.mxu0 0.0
        %745 = vmatpush1.xpose.msra.mxu0 0.0
        %746 = vmatprep.subr.mxu0 0.0
        %747 = vmatpush1.xpose.msra.mxu0 0.0
        %748 = vmatprep.subr.mxu0 0.0
        %749 = vmatpush1.xpose.msra.mxu0 0.0
        %750 = vmatprep.subr.mxu0 0.0
        %751 = vmatpush1.xpose.msra.mxu0 0.0
        %752 = vmatprep.subr.mxu0 0.0
        %753 = vmatpush1.xpose.msra.mxu0 0.0
        %754 = vmatprep.subr.mxu0 0.0
        %755 = vmatpush1.xpose.msra.mxu0 0.0
        %756 = vmatprep.subr.mxu0 0.0
        %757 = vmatpush1.xpose.msra.mxu0 0.0
        %758 = vmatprep.subr.mxu0 0.0
        %759 = vmatpush1.xpose.msra.mxu0 0.0
        %760 = vmatprep.subr.mxu0 0.0
        %761 = vmatpush1.xpose.msra.mxu0 0.0
        %762 = vmatprep.subr.mxu0 0.0
        %763 = vmatpush1.xpose.msra.mxu0 0.0
        %764 = vmatprep.subr.mxu0 0.0
        %765 = vmatpush1.xpose.msra.mxu0 0.0
        %766 = vmatprep.subr.mxu0 0.0
        %767 = vmatpush1.xpose.msra.mxu0 0.0
        %768 = vmatprep.mubr.f32.mxu0 0.0
        %769 = vmatmul.mubr.f32.gmra.mrb[0].mxu0 %v700
        %v770 = vpop.f32.mrb[0].mxu0
        %v771 = vadd.f32 0.0, %v770
        %v772 = vpop.f32.mrb[0].mxu0
        %773 = vdwg.mxu0
        %s774 = scalar_lea.vmem [#allocation2], 16
        %v775 = vld [vmem:[%s774] sm:$0xff]
        %v776 = vsel %vm309, %v771, -inf
        %777 = vmax.xlane.f32.xlu0 %v776
        %v778 = vpop.xlane.xlu0 %777
        %v779 = vmax.f32 %v775, %v778
        %v780 = vsub.f32 %v775, %v779
        %v781 = vmul.f32 %v780, 1.442695
        %v782 = vpow.pop %v781
        %784 = vset.pattern.permute.xlu0 0
        %785 = vperm.xlu0 %784, %v779
        %v786 = vpop.permute.xlu0 %785
        %v788 = vsub.f32 %v771, %v786
        %v789 = vmul.f32 %v788, 1.442695
        %v790 = vpow.pop %v789
        %s791 = scalar_lea.vmem [#allocation3], 16
        %v792 = vld [vmem:[%s791] sm:$0xff]
        %v793 = vmul.f32 %v782, %v792
        %v794 = vsel %vm309, %v790, 0.0
        %795 = vadd.xlane.f32.xlu0 %v794
        %v796 = vpop.xlane.xlu0 %795
        %v797 = vadd.f32 %v793, %v796
        %798 = vst.msk [vmem:[%s791] sm:$0xff] %vm408, %v797
        %s799 = scalar_lea.vmem [#allocation4], 16
        %v800 = vld [vmem:[%s799] sm:$0xff]
        %802 = vset.pattern.permute.xlu0 0
        %803 = vperm.xlu0 %802, %v782
        %v804 = vpop.permute.xlu0 %803
        %v806 = vmul.f32 %v804, %v800
        %808 = vrot.lane.b32.xlu0 %v693, 112
        %v809 = vpop.permute.xlu0 %808
        %v812 = vsel %vm309, %v790, 0
        %814 = vmatprep.subr.mxu0 0.0
        %815 = vmatpush1.msra.mxu0 %v809
        %816 = vmatprep.subr.mxu0 0.0
        %817 = vmatpush1.msra.mxu0 0.0
        %818 = vmatprep.subr.mxu0 0.0
        %819 = vmatpush1.msra.mxu0 0.0
        %820 = vmatprep.subr.mxu0 0.0
        %821 = vmatpush1.msra.mxu0 0.0
        %822 = vmatprep.subr.mxu0 0.0
        %823 = vmatpush1.msra.mxu0 0.0
        %824 = vmatprep.subr.mxu0 0.0
        %825 = vmatpush1.msra.mxu0 0.0
        %826 = vmatprep.subr.mxu0 0.0
        %827 = vmatpush1.msra.mxu0 0.0
        %828 = vmatprep.subr.mxu0 0.0
        %829 = vmatpush1.msra.mxu0 0.0
        %830 = vmatprep.subr.mxu0 0.0
        %831 = vmatpush1.msra.mxu0 0.0
        %832 = vmatprep.subr.mxu0 0.0
        %833 = vmatpush1.msra.mxu0 0.0
        %834 = vmatprep.subr.mxu0 0.0
        %835 = vmatpush1.msra.mxu0 0.0
        %836 = vmatprep.subr.mxu0 0.0
        %837 = vmatpush1.msra.mxu0 0.0
        %838 = vmatprep.subr.mxu0 0.0
        %839 = vmatpush1.msra.mxu0 0.0
        %840 = vmatprep.subr.mxu0 0.0
        %841 = vmatpush1.msra.mxu0 0.0
        %842 = vmatprep.subr.mxu0 0.0
        %843 = vmatpush1.msra.mxu0 0.0
        %844 = vmatprep.subr.mxu0 0.0
        %845 = vmatpush1.msra.mxu0 0.0
        %846 = vmatprep.subr.mxu0 0.0
        %847 = vmatpush1.msra.mxu0 0.0
        %848 = vmatprep.subr.mxu0 0.0
        %849 = vmatpush1.msra.mxu0 0.0
        %850 = vmatprep.subr.mxu0 0.0
        %851 = vmatpush1.msra.mxu0 0.0
        %852 = vmatprep.subr.mxu0 0.0
        %853 = vmatpush1.msra.mxu0 0.0
        %854 = vmatprep.subr.mxu0 0.0
        %855 = vmatpush1.msra.mxu0 0.0
        %856 = vmatprep.subr.mxu0 0.0
        %857 = vmatpush1.msra.mxu0 0.0
        %858 = vmatprep.subr.mxu0 0.0
        %859 = vmatpush1.msra.mxu0 0.0
        %860 = vmatprep.subr.mxu0 0.0
        %861 = vmatpush1.msra.mxu0 0.0
        %862 = vmatprep.subr.mxu0 0.0
        %863 = vmatpush1.msra.mxu0 0.0
        %864 = vmatprep.subr.mxu0 0.0
        %865 = vmatpush1.msra.mxu0 0.0
        %866 = vmatprep.subr.mxu0 0.0
        %867 = vmatpush1.msra.mxu0 0.0
        %868 = vmatprep.subr.mxu0 0.0
        %869 = vmatpush1.msra.mxu0 0.0
        %870 = vmatprep.subr.mxu0 0.0
        %871 = vmatpush1.msra.mxu0 0.0
        %872 = vmatprep.subr.mxu0 0.0
        %873 = vmatpush1.msra.mxu0 0.0
        %874 = vmatprep.subr.mxu0 0.0
        %875 = vmatpush1.msra.mxu0 0.0
        %876 = vmatprep.subr.mxu0 0.0
        %877 = vmatpush1.msra.mxu0 0.0
        %878 = vmatprep.mubr.f32.mxu0 0.0
        %879 = vmatmul.mubr.f32.gmra.mrb[0].mxu0 %v812
        %v880 = vpop.f32.mrb[0].mxu0
        %v881 = vadd.f32 0.0, %v880
        %v882 = vpop.f32.mrb[0].mxu0
        %883 = vdwg.mxu0
        %v884 = vadd.f32 %v806, %v881
        %885 = vst.msk [vmem:[%s799] sm:$0xff] %vm309, %v884
        %886 = vst.msk [vmem:[%s774] sm:$0xff] %vm408, %v779
        %v887 = vld [vmem:[%s236] sm:$0xff]
        %v888 = vmul.f32 %v887, 2.828427
        %v889 = vld [vmem:[%s245] sm:$0xff]
        %v890 = vld [vmem:[%s254] sm:$0xff]
        %892 = vrot.lane.b32.xlu0 %v888, 104
        %v893 = vpop.permute.xlu0 %892
        %895 = vrot.lane.b32.xlu0 %v889, 104
        %v896 = vpop.permute.xlu0 %895
        %v897 = vsel %vm309, %v893, 0
        %v899 = vsel %vm309, %v896, 0
        %901 = vmatprep.subr.mxu0 0.0
        %902 = vmatpush1.xpose.msra.mxu0 %v899
        %903 = vmatprep.subr.mxu0 0.0
        %904 = vmatpush1.xpose.msra.mxu0 0.0
        %905 = vmatprep.subr.mxu0 0.0
        %906 = vmatpush1.xpose.msra.mxu0 0.0
        %907 = vmatprep.subr.mxu0 0.0
        %908 = vmatpush1.xpose.msra.mxu0 0.0
        %909 = vmatprep.subr.mxu0 0.0
        %910 = vmatpush1.xpose.msra.mxu0 0.0
        %911 = vmatprep.subr.mxu0 0.0
        %912 = vmatpush1.xpose.msra.mxu0 0.0
        %913 = vmatprep.subr.mxu0 0.0
        %914 = vmatpush1.xpose.msra.mxu0 0.0
        %915 = vmatprep.subr.mxu0 0.0
        %916 = vmatpush1.xpose.msra.mxu0 0.0
        %917 = vmatprep.subr.mxu0 0.0
        %918 = vmatpush1.xpose.msra.mxu0 0.0
        %919 = vmatprep.subr.mxu0 0.0
        %920 = vmatpush1.xpose.msra.mxu0 0.0
        %921 = vmatprep.subr.mxu0 0.0
        %922 = vmatpush1.xpose.msra.mxu0 0.0
        %923 = vmatprep.subr.mxu0 0.0
        %924 = vmatpush1.xpose.msra.mxu0 0.0
        %925 = vmatprep.subr.mxu0 0.0
        %926 = vmatpush1.xpose.msra.mxu0 0.0
        %927 = vmatprep.subr.mxu0 0.0
        %928 = vmatpush1.xpose.msra.mxu0 0.0
        %929 = vmatprep.subr.mxu0 0.0
        %930 = vmatpush1.xpose.msra.mxu0 0.0
        %931 = vmatprep.subr.mxu0 0.0
        %932 = vmatpush1.xpose.msra.mxu0 0.0
        %933 = vmatprep.subr.mxu0 0.0
        %934 = vmatpush1.xpose.msra.mxu0 0.0
        %935 = vmatprep.subr.mxu0 0.0
        %936 = vmatpush1.xpose.msra.mxu0 0.0
        %937 = vmatprep.subr.mxu0 0.0
        %938 = vmatpush1.xpose.msra.mxu0 0.0
        %939 = vmatprep.subr.mxu0 0.0
        %940 = vmatpush1.xpose.msra.mxu0 0.0
        %941 = vmatprep.subr.mxu0 0.0
        %942 = vmatpush1.xpose.msra.mxu0 0.0
        %943 = vmatprep.subr.mxu0 0.0
        %944 = vmatpush1.xpose.msra.mxu0 0.0
        %945 = vmatprep.subr.mxu0 0.0
        %946 = vmatpush1.xpose.msra.mxu0 0.0
        %947 = vmatprep.subr.mxu0 0.0
        %948 = vmatpush1.xpose.msra.mxu0 0.0
        %949 = vmatprep.subr.mxu0 0.0
        %950 = vmatpush1.xpose.msra.mxu0 0.0
        %951 = vmatprep.subr.mxu0 0.0
        %952 = vmatpush1.xpose.msra.mxu0 0.0
        %953 = vmatprep.subr.mxu0 0.0
        %954 = vmatpush1.xpose.msra.mxu0 0.0
        %955 = vmatprep.subr.mxu0 0.0
        %956 = vmatpush1.xpose.msra.mxu0 0.0
        %957 = vmatprep.subr.mxu0 0.0
        %958 = vmatpush1.xpose.msra.mxu0 0.0
        %959 = vmatprep.subr.mxu0 0.0
        %960 = vmatpush1.xpose.msra.mxu0 0.0
        %961 = vmatprep.subr.mxu0 0.0
        %962 = vmatpush1.xpose.msra.mxu0 0.0
        %963 = vmatprep.subr.mxu0 0.0
        %964 = vmatpush1.xpose.msra.mxu0 0.0
        %965 = vmatprep.mubr.f32.mxu0 0.0
        %966 = vmatmul.mubr.f32.gmra.mrb[0].mxu0 %v897
        %v967 = vpop.f32.mrb[0].mxu0
        %v968 = vadd.f32 0.0, %v967
        %v969 = vpop.f32.mrb[0].mxu0
        %970 = vdwg.mxu0
        %s971 = scalar_lea.vmem [#allocation2], 24
        %v972 = vld [vmem:[%s971] sm:$0xff]
        %v973 = vsel %vm309, %v968, -inf
        %974 = vmax.xlane.f32.xlu0 %v973
        %v975 = vpop.xlane.xlu0 %974
        %v976 = vmax.f32 %v972, %v975
        %v977 = vsub.f32 %v972, %v976
        %v978 = vmul.f32 %v977, 1.442695
        %v979 = vpow.pop %v978
        %981 = vset.pattern.permute.xlu0 0
        %982 = vperm.xlu0 %981, %v976
        %v983 = vpop.permute.xlu0 %982
        %v985 = vsub.f32 %v968, %v983
        %v986 = vmul.f32 %v985, 1.442695
        %v987 = vpow.pop %v986
        %s988 = scalar_lea.vmem [#allocation3], 24
        %v989 = vld [vmem:[%s988] sm:$0xff]
        %v990 = vmul.f32 %v979, %v989
        %v991 = vsel %vm309, %v987, 0.0
        %992 = vadd.xlane.f32.xlu0 %v991
        %v993 = vpop.xlane.xlu0 %992
        %v994 = vadd.f32 %v990, %v993
        %995 = vst.msk [vmem:[%s988] sm:$0xff] %vm408, %v994
        %s996 = scalar_lea.vmem [#allocation4], 24
        %v997 = vld [vmem:[%s996] sm:$0xff]
        %999 = vset.pattern.permute.xlu0 0
        %1000 = vperm.xlu0 %999, %v979
        %v1001 = vpop.permute.xlu0 %1000
        %v1003 = vmul.f32 %v1001, %v997
        %1005 = vrot.lane.b32.xlu0 %v890, 104
        %v1006 = vpop.permute.xlu0 %1005
        %v1009 = vsel %vm309, %v987, 0
        %1011 = vmatprep.subr.mxu0 0.0
        %1012 = vmatpush1.msra.mxu0 %v1006
        %1013 = vmatprep.subr.mxu0 0.0
        %1014 = vmatpush1.msra.mxu0 0.0
        %1015 = vmatprep.subr.mxu0 0.0
        %1016 = vmatpush1.msra.mxu0 0.0
        %1017 = vmatprep.subr.mxu0 0.0
        %1018 = vmatpush1.msra.mxu0 0.0
        %1019 = vmatprep.subr.mxu0 0.0
        %1020 = vmatpush1.msra.mxu0 0.0
        %1021 = vmatprep.subr.mxu0 0.0
        %1022 = vmatpush1.msra.mxu0 0.0
        %1023 = vmatprep.subr.mxu0 0.0
        %1024 = vmatpush1.msra.mxu0 0.0
        %1025 = vmatprep.subr.mxu0 0.0
        %1026 = vmatpush1.msra.mxu0 0.0
        %1027 = vmatprep.subr.mxu0 0.0
        %1028 = vmatpush1.msra.mxu0 0.0
        %1029 = vmatprep.subr.mxu0 0.0
        %1030 = vmatpush1.msra.mxu0 0.0
        %1031 = vmatprep.subr.mxu0 0.0
        %1032 = vmatpush1.msra.mxu0 0.0
        %1033 = vmatprep.subr.mxu0 0.0
        %1034 = vmatpush1.msra.mxu0 0.0
        %1035 = vmatprep.subr.mxu0 0.0
        %1036 = vmatpush1.msra.mxu0 0.0
        %1037 = vmatprep.subr.mxu0 0.0
        %1038 = vmatpush1.msra.mxu0 0.0
        %1039 = vmatprep.subr.mxu0 0.0
        %1040 = vmatpush1.msra.mxu0 0.0
        %1041 = vmatprep.subr.mxu0 0.0
        %1042 = vmatpush1.msra.mxu0 0.0
        %1043 = vmatprep.subr.mxu0 0.0
        %1044 = vmatpush1.msra.mxu0 0.0
        %1045 = vmatprep.subr.mxu0 0.0
        %1046 = vmatpush1.msra.mxu0 0.0
        %1047 = vmatprep.subr.mxu0 0.0
        %1048 = vmatpush1.msra.mxu0 0.0
        %1049 = vmatprep.subr.mxu0 0.0
        %1050 = vmatpush1.msra.mxu0 0.0
        %1051 = vmatprep.subr.mxu0 0.0
        %1052 = vmatpush1.msra.mxu0 0.0
        %1053 = vmatprep.subr.mxu0 0.0
        %1054 = vmatpush1.msra.mxu0 0.0
        %1055 = vmatprep.subr.mxu0 0.0
        %1056 = vmatpush1.msra.mxu0 0.0
        %1057 = vmatprep.subr.mxu0 0.0
        %1058 = vmatpush1.msra.mxu0 0.0
        %1059 = vmatprep.subr.mxu0 0.0
        %1060 = vmatpush1.msra.mxu0 0.0
        %1061 = vmatprep.subr.mxu0 0.0
        %1062 = vmatpush1.msra.mxu0 0.0
        %1063 = vmatprep.subr.mxu0 0.0
        %1064 = vmatpush1.msra.mxu0 0.0
        %1065 = vmatprep.subr.mxu0 0.0
        %1066 = vmatpush1.msra.mxu0 0.0
        %1067 = vmatprep.subr.mxu0 0.0
        %1068 = vmatpush1.msra.mxu0 0.0
        %1069 = vmatprep.subr.mxu0 0.0
        %1070 = vmatpush1.msra.mxu0 0.0
        %1071 = vmatprep.subr.mxu0 0.0
        %1072 = vmatpush1.msra.mxu0 0.0
        %1073 = vmatprep.subr.mxu0 0.0
        %1074 = vmatpush1.msra.mxu0 0.0
        %1075 = vmatprep.mubr.f32.mxu0 0.0
        %1076 = vmatmul.mubr.f32.gmra.mrb[0].mxu0 %v1009
        %v1077 = vpop.f32.mrb[0].mxu0
        %v1078 = vadd.f32 0.0, %v1077
        %v1079 = vpop.f32.mrb[0].mxu0
        %1080 = vdwg.mxu0
        %v1081 = vadd.f32 %v1003, %v1078
        %1082 = vst.msk [vmem:[%s996] sm:$0xff] %vm309, %v1081
        %1083 = vst.msk [vmem:[%s971] sm:$0xff] %vm408, %v976
        // Predicated region
        $region49: #{tpu_custom_call.1} parent=31 // pred_check
          %p1084 = pneg %p287
        $region50: #{tpu_custom_call.1} parent=31 // pred_check_branch
          %1086 = sbr.rel (%p1084) target = $region52
        $region51: #{tpu_custom_call.1} parent=31 // pred_region
          %v1087 = vld [vmem:[#allocation4] sm:$0xff]
          %v1088 = vld [vmem:[#allocation3] sm:$0xff]
          %1090 = vset.pattern.permute.xlu0 0
          %1091 = vperm.xlu0 %1090, %v1088
          %v1092 = vpop.permute.xlu0 %1091
          %v1094 = vrcp.pop %v1092
          %v1095 = vmul.f32 %v1087, %v1094
          %1096 = vst.msk [vmem:[%s286] sm:$0xff] %vm309, %v1095
          %v1097 = vld [vmem:[%s602] sm:$0xff]
          %v1098 = vld [vmem:[%s594] sm:$0xff]
          %1100 = vset.pattern.permute.xlu0 0
          %1101 = vperm.xlu0 %1100, %v1098
          %v1102 = vpop.permute.xlu0 %1101
          %v1104 = vrcp.pop %v1102
          %v1105 = vmul.f32 %v1097, %v1104
          %1107 = vrot.lane.b32.xlu0 %v1105, 8
          %v1108 = vpop.permute.xlu0 %1107
          %vm1110 = vcmask 130112
          %1111 = vst.msk [vmem:[%s286] sm:$0xff] %vm1110, %v1108
          %v1112 = vld [vmem:[%s799] sm:$0xff]
          %v1113 = vld [vmem:[%s791] sm:$0xff]
          %1115 = vset.pattern.permute.xlu0 0
          %1116 = vperm.xlu0 %1115, %v1113
          %v1117 = vpop.permute.xlu0 %1116
          %v1119 = vrcp.pop %v1117
          %v1120 = vmul.f32 %v1112, %v1119
          %1122 = vrot.lane.b32.xlu0 %v1120, 16
          %v1123 = vpop.permute.xlu0 %1122
          %vm1125 = vcmask 195712
          %1126 = vst.msk [vmem:[%s286] sm:$0xff] %vm1125, %v1123
          %v1127 = vld [vmem:[%s996] sm:$0xff]
          %v1128 = vld [vmem:[%s988] sm:$0xff]
          %1130 = vset.pattern.permute.xlu0 0
          %1131 = vperm.xlu0 %1130, %v1128
          %v1132 = vpop.permute.xlu0 %1131
          %v1134 = vrcp.pop %v1132
          %v1135 = vmul.f32 %v1127, %v1134
          %1137 = vrot.lane.b32.xlu0 %v1135, 24
          %v1138 = vpop.permute.xlu0 %1137
          %vm1140 = vcmask 261312
          %1141 = vst.msk [vmem:[%s286] sm:$0xff] %vm1140, %v1138
        $region52: #{tpu_custom_call.1} parent=31 // pred_fallthru
          _
        %s1142 = sand.u32 %s136, 1
        %s1143 = scalar_lea.sflag [#allocation7], %s1142
        %s1144 = sand.u32 %s136, 1
        %s1145 = smul.addr %s1144, 8
        %s1146 = scalar_lea.vmem [#allocation11], %s1145
        // Predicated region
        $region53: #{tpu_custom_call.1} parent=31 // pred_check
          %p1147 = pneg %p146
        $region54: #{tpu_custom_call.1} parent=31 // pred_check_branch
          %1149 = sbr.rel (%p1147) target = $region56
        $region55: #{tpu_custom_call.1} parent=31 // pred_region
          %s1151 = ssub.s32 128, 128
          %1152 = vsyncadd %s1143, %s1151
          %s1153 = sadd.s32 %s29, %s28
          %s1154 = smul.addr %s1153, 128
          %s1155 = scalar_lea.hbm %s3, %s1154
          %s1157 = sshll.u32 %s1146, 4
          %s1158 = int_to_ptr.vmem [resolvable:$true] %s1157
          %1160 = dma.vmem_to_hbm [thread:$0]  %s1158, 128, %s1155, %s1143
        $region56: #{tpu_custom_call.1} parent=31 // pred_fallthru
          _
      $region32: #{tpu_custom_call.1} parent=5 // pred_fallthru
        _
      %p1161 = scmp.le.s32.totalorder 2, %s18
      // Predicated region
      $region57: #{tpu_custom_call.1} parent=5 // pred_check
        %p1162 = pneg %p1161
      $region58: #{tpu_custom_call.1} parent=5 // pred_check_branch
        %1164 = sbr.rel (%p1162) target = $region60
      $region59: #{tpu_custom_call.1} parent=5 // pred_region
        %s1165 = ssub.s32 %s18, 2
        // Predicated region
        $region61: #{tpu_custom_call.1} parent=59 // pred_check
          %p1166 = pneg %p152
        $region62: #{tpu_custom_call.1} parent=59 // pred_check_branch
          %1168 = sbr.rel (%p1166) target = $region64
        $region63: #{tpu_custom_call.1} parent=59 // pred_region
          %s1169 = sand.u32 %s137, 1
          %s1170 = scalar_lea.sflag [#allocation7], %s1169
          %s1171 = sand.u32 %s137, 1
          %s1172 = smul.addr %s1171, 8
          %s1173 = scalar_lea.vmem [#allocation11], %s1172
          %1174 = dma.done %s1170, 128
        $region64: #{tpu_custom_call.1} parent=59 // pred_fallthru
          _
      $region60: #{tpu_custom_call.1} parent=5 // pred_fallthru
        _
    $region6: #{tpu_custom_call.1} parent=1 // loop_footer
      %s22 = sadd.s32 1, %s18
    $region7: #{tpu_custom_call.1} parent=1 // loop_footer_branch
      %17 = sbr.rel target = $region3
    $region8: #{tpu_custom_call.1} parent=1 // loop_exit
      _
    %1175 = vsyncpa [#allocation6], 1
    %s1176 = scalar_lea.sflag [#allocation6], 1
    %1177 = vsyncpa %s1176, 1
    %1178 = vsyncpa [#allocation9], 1
    %s1179 = scalar_lea.sflag [#allocation9], 1
    %1180 = vsyncpa %s1179, 1
    %1181 = vsyncpa [#allocation7], 1
    %s1182 = scalar_lea.sflag [#allocation7], 1
    %1183 = vsyncpa %s1182, 1

</llo_original>
